<compile_context>
chip_gen: v6e
topology: v6e:2x2x1
jax: 0.10.0
libtpu: 0.0.40
codegen_flags: <defaults>
</compile_context>

<pallas_src>
import functools

import jax
import jax.numpy as jnp
from jax.experimental import pallas as pl
from jax.experimental.pallas import tpu as pltpu

N_IN, H1, H2, N_OUT = 8, 6, 4, 1
LANES = 128                 # vreg lane width
SUBLANES = 8                # f32 sublane granularity
MIN_TILE = SUBLANES * LANES  # 1024 rows: smallest dense batch tile (padding unit)


def mlp_kernel(x_ref, w1_ref, b1_ref, w2_ref, b2_ref, w3_ref, b3_ref, o_ref):
    """One batch tile.

    x_ref : (8, block_rows, 128)  VMEM  -- feature-major batch slab (dense vregs)
    w*_ref: (out, in)             SMEM  -- torch.nn.Linear weight layout
    b*_ref: (out,)                SMEM
    o_ref : (block_rows, 128)     VMEM  -- lane-dense output slab
    """
    # Per-feature slabs, each (block_rows, 128): fully dense vector registers.
    feats = [x_ref[k] for k in range(N_IN)]

    def sigmoid(x):
        # sigmoid(x) == 0.5*tanh(0.5*x) + 0.5 : exactly one EUP push per element
        # (vs exp + divide); the extra mul/add ride in VPU slack.
        return 0.5 * jnp.tanh(0.5 * x) + 0.5

    def dense_sigmoid(rows, w_ref, b_ref, n_out):
        outs = []
        for j in range(n_out):
            # Bias folded into the FMA chain; pure VPU math (no MXU), EUP tanh.
            acc = rows[0] * w_ref[j, 0] + b_ref[j]
            for k in range(1, len(rows)):
                acc = acc + rows[k] * w_ref[j, k]
            outs.append(sigmoid(acc))
        return outs

    h = dense_sigmoid(feats, w1_ref, b1_ref, H1)
    h = dense_sigmoid(h, w2_ref, b2_ref, H2)
    h = dense_sigmoid(h, w3_ref, b3_ref, N_OUT)
    o_ref[...] = h[0]  # (block_rows, 128), unmasked dense f32 store


def _pick_block_rows(nb, target=256):
    """nb (number of 128-row groups) is a multiple of 8.

    Return the largest multiple of 8 that divides nb, is <= target, and -- when
    possible -- yields a grid of >= 2 (preferably even) steps, so both v7x
    TensorCores get balanced work and DMA/compute overlap survives.
    """
    target = max(SUBLANES, target)
    divisors = [r for r in range(SUBLANES, nb + 1, SUBLANES) if nb % r == 0]
    prefs = (
        lambda r: (nb // r) >= 2 and (nb // r) % 2 == 0,  # even multi-step grid
        lambda r: (nb // r) >= 2,                         # at least 2 steps
        lambda r: True,                                   # any divisor
    )
    for pred in prefs:
        cand = [r for r in divisors if r <= target and pred(r)]
        if cand:
            return max(cand)
    return SUBLANES


@functools.partial(jax.jit, static_argnames=("block_rows",))
def titanic_mlp(x, w1, b1, w2, b2, w3, b3, *, block_rows=None):
    """x: (batch, 8) float32 (PyTorch layout) -> (batch, 1) float32."""
    batch = x.shape[0]

    # Pad the batch only to the minimum dense-tile granularity (1024 rows); the
    # batch tile is chosen independently so large tiles never force large pads.
    bp = ((batch + MIN_TILE - 1) // MIN_TILE) * MIN_TILE
    nb = bp // LANES  # number of 128-row groups (always a multiple of 8)

    if block_rows is None:
        # ~256*128 = 32K rows per grid step amortizes the ~0.35us/step overhead
        # while keeping per-step VMEM (~5 MiB incl. temporaries) well inside
        # every generation's budget.
        block_rows = _pick_block_rows(nb, target=256)
    assert block_rows % SUBLANES == 0, (
        "block_rows must be a multiple of 8 (f32 sublane tiling)")
    assert nb % block_rows == 0, "block_rows must evenly divide the padded batch"

    xp = jnp.pad(x.astype(jnp.float32), ((0, bp - batch), (0, 0)))
    # Feature-major layout: (8, nb, 128) -- batch fills sublanes AND lanes.
    # This transpose is one extra HBM pass; a producer that can emit
    # feature-major (8, batch) data should feed it directly and skip this.
    xt = xp.T.reshape(N_IN, nb, LANES)

    # Tiny weights/biases stay whole-array resident in SMEM; their block index
    # never changes, so they are copied in once for the whole grid.
    smem = pl.BlockSpec(memory_space=pltpu.MemorySpace.SMEM)

    out = pl.pallas_call(
        mlp_kernel,
        out_shape=jax.ShapeDtypeStruct((nb, LANES), jnp.float32),
        grid_spec=pltpu.PrefetchScalarGridSpec(
            num_scalar_prefetch=0,
            grid=(nb // block_rows,),
            in_specs=[
                pl.BlockSpec((N_IN, block_rows, LANES), lambda i: (0, i, 0)),
                smem, smem, smem, smem, smem, smem,
            ],
            out_specs=pl.BlockSpec((block_rows, LANES), lambda i: (i, 0)),
        ),
        compiler_params=pltpu.CompilerParams(
            dimension_semantics=("parallel",),
            vmem_limit_bytes=32 * 1024 * 1024,
        ),
    )(xt, w1, b1, w2, b2, w3, b3)

    return out.reshape(bp)[:batch].reshape(batch, 1)


def init_params(key):
    """torch.nn.Linear-style init: W (out, in), b (out,), uniform +-1/sqrt(fan_in)."""
    dims = [(N_IN, H1), (H1, H2), (H2, N_OUT)]
    params = []
    for fan_in, fan_out in dims:
        key, kw, kb = jax.random.split(key, 3)
        bound = 1.0 / (fan_in ** 0.5)
        w = jax.random.uniform(kw, (fan_out, fan_in), jnp.float32, -bound, bound)
        b = jax.random.uniform(kb, (fan_out,), jnp.float32, -bound, bound)
        params += [w, b]
    return params


def _reference(x, w1, b1, w2, b2, w3, b3):
    h = jax.nn.sigmoid(x @ w1.T + b1)
    h = jax.nn.sigmoid(h @ w2.T + b2)
    return jax.nn.sigmoid(h @ w3.T + b3)


if __name__ == "__main__":
    key = jax.random.PRNGKey(0)
    key, kx1, kx2 = jax.random.split(key, 3)
    w1, b1, w2, b2, w3, b3 = init_params(key)

    # Small batch: not a multiple of 1024 -> exercises padding + multi-step grid.
    batch_small = 2500
    x_small = jax.random.normal(kx1, (batch_small, N_IN), jnp.float32)
    out_small = jax.block_until_ready(titanic_mlp(x_small, w1, b1, w2, b2, w3, b3))
    ref_small = _reference(x_small, w1, b1, w2, b2, w3, b3)
    assert out_small.shape == (batch_small, 1)
    assert jnp.allclose(out_small, ref_small, atol=1e-5), "mismatch vs reference (small)"

    # Larger batch: exercises the adaptive tile (block_rows=80, even 2-step grid).
    batch_big = 20000
    x_big = jax.random.normal(kx2, (batch_big, N_IN), jnp.float32)
    out_big = jax.block_until_ready(titanic_mlp(x_big, w1, b1, w2, b2, w3, b3))
    ref_big = _reference(x_big, w1, b1, w2, b2, w3, b3)
    assert out_big.shape == (batch_big, 1)
    assert jnp.allclose(out_big, ref_big, atol=1e-5), "mismatch vs reference (big)"

    print("KERNEL_OK")
</pallas_src>

<mosaic_0001>
module attributes {stable_mosaic.version = 11 : i64} {
  func.func @mlp_kernel(%arg0: i32, %arg1: memref<8x8x128xf32, #tpu.memory_space<vmem>>, %arg2: memref<6x8xf32, #tpu.memory_space<smem>>, %arg3: memref<6xf32, #tpu.memory_space<smem>>, %arg4: memref<4x6xf32, #tpu.memory_space<smem>>, %arg5: memref<4xf32, #tpu.memory_space<smem>>, %arg6: memref<1x4xf32, #tpu.memory_space<smem>>, %arg7: memref<1xf32, #tpu.memory_space<smem>>, %arg8: memref<8x128xf32, #tpu.memory_space<vmem>>) attributes {dimension_semantics = [#tpu.dimension_semantics<parallel>], iteration_bounds = array<i64: 3>, scalar_prefetch = 0 : i64, scratch_operands = 0 : i64, tpu.core_type = #tpu.core_type<tc>, window_params = [{transform_indices = @transform_0, window_bounds = array<i64: 8, 8, 128>}, {transform_indices = @transform_1, window_bounds = array<i64: 6, 8>}, {transform_indices = @transform_2, window_bounds = array<i64: 6>}, {transform_indices = @transform_3, window_bounds = array<i64: 4, 6>}, {transform_indices = @transform_4, window_bounds = array<i64: 4>}, {transform_indices = @transform_5, window_bounds = array<i64: 1, 4>}, {transform_indices = @transform_6, window_bounds = array<i64: 1>}, {transform_indices = @transform_7, window_bounds = array<i64: 8, 128>}]} {
    %c0 = arith.constant 0 : index
    %c0_0 = arith.constant 0 : index
    %c0_1 = arith.constant 0 : index
    %0 = vector.load %arg1[%c0, %c0_0, %c0_1] : memref<8x8x128xf32, #tpu.memory_space<vmem>>, vector<1x8x128xf32>
    %1 = vector.shape_cast %0 : vector<1x8x128xf32> to vector<8x128xf32>
    %c1 = arith.constant 1 : index
    %c0_2 = arith.constant 0 : index
    %c0_3 = arith.constant 0 : index
    %2 = vector.load %arg1[%c1, %c0_2, %c0_3] : memref<8x8x128xf32, #tpu.memory_space<vmem>>, vector<1x8x128xf32>
    %3 = vector.shape_cast %2 : vector<1x8x128xf32> to vector<8x128xf32>
    %c2 = arith.constant 2 : index
    %c0_4 = arith.constant 0 : index
    %c0_5 = arith.constant 0 : index
    %4 = vector.load %arg1[%c2, %c0_4, %c0_5] : memref<8x8x128xf32, #tpu.memory_space<vmem>>, vector<1x8x128xf32>
    %5 = vector.shape_cast %4 : vector<1x8x128xf32> to vector<8x128xf32>
    %c3 = arith.constant 3 : index
    %c0_6 = arith.constant 0 : index
    %c0_7 = arith.constant 0 : index
    %6 = vector.load %arg1[%c3, %c0_6, %c0_7] : memref<8x8x128xf32, #tpu.memory_space<vmem>>, vector<1x8x128xf32>
    %7 = vector.shape_cast %6 : vector<1x8x128xf32> to vector<8x128xf32>
    %c4 = arith.constant 4 : index
    %c0_8 = arith.constant 0 : index
    %c0_9 = arith.constant 0 : index
    %8 = vector.load %arg1[%c4, %c0_8, %c0_9] : memref<8x8x128xf32, #tpu.memory_space<vmem>>, vector<1x8x128xf32>
    %9 = vector.shape_cast %8 : vector<1x8x128xf32> to vector<8x128xf32>
    %c5 = arith.constant 5 : index
    %c0_10 = arith.constant 0 : index
    %c0_11 = arith.constant 0 : index
    %10 = vector.load %arg1[%c5, %c0_10, %c0_11] : memref<8x8x128xf32, #tpu.memory_space<vmem>>, vector<1x8x128xf32>
    %11 = vector.shape_cast %10 : vector<1x8x128xf32> to vector<8x128xf32>
    %c6 = arith.constant 6 : index
    %c0_12 = arith.constant 0 : index
    %c0_13 = arith.constant 0 : index
    %12 = vector.load %arg1[%c6, %c0_12, %c0_13] : memref<8x8x128xf32, #tpu.memory_space<vmem>>, vector<1x8x128xf32>
    %13 = vector.shape_cast %12 : vector<1x8x128xf32> to vector<8x128xf32>
    %c7 = arith.constant 7 : index
    %c0_14 = arith.constant 0 : index
    %c0_15 = arith.constant 0 : index
    %14 = vector.load %arg1[%c7, %c0_14, %c0_15] : memref<8x8x128xf32, #tpu.memory_space<vmem>>, vector<1x8x128xf32>
    %15 = vector.shape_cast %14 : vector<1x8x128xf32> to vector<8x128xf32>
    %c0_16 = arith.constant 0 : index
    %c0_17 = arith.constant 0 : index
    %16 = memref.load %arg2[%c0_16, %c0_17] : memref<6x8xf32, #tpu.memory_space<smem>>
    %17 = vector.broadcast %16 : f32 to vector<8x128xf32>
    %18 = arith.mulf %1, %17 : vector<8x128xf32>
    %c0_18 = arith.constant 0 : index
    %19 = memref.load %arg3[%c0_18] : memref<6xf32, #tpu.memory_space<smem>>
    %20 = vector.broadcast %19 : f32 to vector<8x128xf32>
    %21 = arith.addf %18, %20 : vector<8x128xf32>
    %c0_19 = arith.constant 0 : index
    %c1_20 = arith.constant 1 : index
    %22 = memref.load %arg2[%c0_19, %c1_20] : memref<6x8xf32, #tpu.memory_space<smem>>
    %23 = vector.broadcast %22 : f32 to vector<8x128xf32>
    %24 = arith.mulf %3, %23 : vector<8x128xf32>
    %25 = arith.addf %21, %24 : vector<8x128xf32>
    %c0_21 = arith.constant 0 : index
    %c2_22 = arith.constant 2 : index
    %26 = memref.load %arg2[%c0_21, %c2_22] : memref<6x8xf32, #tpu.memory_space<smem>>
    %27 = vector.broadcast %26 : f32 to vector<8x128xf32>
    %28 = arith.mulf %5, %27 : vector<8x128xf32>
    %29 = arith.addf %25, %28 : vector<8x128xf32>
    %c0_23 = arith.constant 0 : index
    %c3_24 = arith.constant 3 : index
    %30 = memref.load %arg2[%c0_23, %c3_24] : memref<6x8xf32, #tpu.memory_space<smem>>
    %31 = vector.broadcast %30 : f32 to vector<8x128xf32>
    %32 = arith.mulf %7, %31 : vector<8x128xf32>
    %33 = arith.addf %29, %32 : vector<8x128xf32>
    %c0_25 = arith.constant 0 : index
    %c4_26 = arith.constant 4 : index
    %34 = memref.load %arg2[%c0_25, %c4_26] : memref<6x8xf32, #tpu.memory_space<smem>>
    %35 = vector.broadcast %34 : f32 to vector<8x128xf32>
    %36 = arith.mulf %9, %35 : vector<8x128xf32>
    %37 = arith.addf %33, %36 : vector<8x128xf32>
    %c0_27 = arith.constant 0 : index
    %c5_28 = arith.constant 5 : index
    %38 = memref.load %arg2[%c0_27, %c5_28] : memref<6x8xf32, #tpu.memory_space<smem>>
    %39 = vector.broadcast %38 : f32 to vector<8x128xf32>
    %40 = arith.mulf %11, %39 : vector<8x128xf32>
    %41 = arith.addf %37, %40 : vector<8x128xf32>
    %c0_29 = arith.constant 0 : index
    %c6_30 = arith.constant 6 : index
    %42 = memref.load %arg2[%c0_29, %c6_30] : memref<6x8xf32, #tpu.memory_space<smem>>
    %43 = vector.broadcast %42 : f32 to vector<8x128xf32>
    %44 = arith.mulf %13, %43 : vector<8x128xf32>
    %45 = arith.addf %41, %44 : vector<8x128xf32>
    %c0_31 = arith.constant 0 : index
    %c7_32 = arith.constant 7 : index
    %46 = memref.load %arg2[%c0_31, %c7_32] : memref<6x8xf32, #tpu.memory_space<smem>>
    %47 = vector.broadcast %46 : f32 to vector<8x128xf32>
    %48 = arith.mulf %15, %47 : vector<8x128xf32>
    %49 = arith.addf %45, %48 : vector<8x128xf32>
    %cst = arith.constant 5.000000e-01 : f32
    %50 = vector.broadcast %cst : f32 to vector<8x128xf32>
    %51 = arith.mulf %50, %49 : vector<8x128xf32>
    %52 = math.tanh %51 : vector<8x128xf32>
    %cst_33 = arith.constant 5.000000e-01 : f32
    %53 = vector.broadcast %cst_33 : f32 to vector<8x128xf32>
    %54 = arith.mulf %53, %52 : vector<8x128xf32>
    %cst_34 = arith.constant 5.000000e-01 : f32
    %55 = vector.broadcast %cst_34 : f32 to vector<8x128xf32>
    %56 = arith.addf %54, %55 : vector<8x128xf32>
    %c1_35 = arith.constant 1 : index
    %c0_36 = arith.constant 0 : index
    %57 = memref.load %arg2[%c1_35, %c0_36] : memref<6x8xf32, #tpu.memory_space<smem>>
    %58 = vector.broadcast %57 : f32 to vector<8x128xf32>
    %59 = arith.mulf %1, %58 : vector<8x128xf32>
    %c1_37 = arith.constant 1 : index
    %60 = memref.load %arg3[%c1_37] : memref<6xf32, #tpu.memory_space<smem>>
    %61 = vector.broadcast %60 : f32 to vector<8x128xf32>
    %62 = arith.addf %59, %61 : vector<8x128xf32>
    %c1_38 = arith.constant 1 : index
    %c1_39 = arith.constant 1 : index
    %63 = memref.load %arg2[%c1_38, %c1_39] : memref<6x8xf32, #tpu.memory_space<smem>>
    %64 = vector.broadcast %63 : f32 to vector<8x128xf32>
    %65 = arith.mulf %3, %64 : vector<8x128xf32>
    %66 = arith.addf %62, %65 : vector<8x128xf32>
    %c1_40 = arith.constant 1 : index
    %c2_41 = arith.constant 2 : index
    %67 = memref.load %arg2[%c1_40, %c2_41] : memref<6x8xf32, #tpu.memory_space<smem>>
    %68 = vector.broadcast %67 : f32 to vector<8x128xf32>
    %69 = arith.mulf %5, %68 : vector<8x128xf32>
    %70 = arith.addf %66, %69 : vector<8x128xf32>
    %c1_42 = arith.constant 1 : index
    %c3_43 = arith.constant 3 : index
    %71 = memref.load %arg2[%c1_42, %c3_43] : memref<6x8xf32, #tpu.memory_space<smem>>
    %72 = vector.broadcast %71 : f32 to vector<8x128xf32>
    %73 = arith.mulf %7, %72 : vector<8x128xf32>
    %74 = arith.addf %70, %73 : vector<8x128xf32>
    %c1_44 = arith.constant 1 : index
    %c4_45 = arith.constant 4 : index
    %75 = memref.load %arg2[%c1_44, %c4_45] : memref<6x8xf32, #tpu.memory_space<smem>>
    %76 = vector.broadcast %75 : f32 to vector<8x128xf32>
    %77 = arith.mulf %9, %76 : vector<8x128xf32>
    %78 = arith.addf %74, %77 : vector<8x128xf32>
    %c1_46 = arith.constant 1 : index
    %c5_47 = arith.constant 5 : index
    %79 = memref.load %arg2[%c1_46, %c5_47] : memref<6x8xf32, #tpu.memory_space<smem>>
    %80 = vector.broadcast %79 : f32 to vector<8x128xf32>
    %81 = arith.mulf %11, %80 : vector<8x128xf32>
    %82 = arith.addf %78, %81 : vector<8x128xf32>
    %c1_48 = arith.constant 1 : index
    %c6_49 = arith.constant 6 : index
    %83 = memref.load %arg2[%c1_48, %c6_49] : memref<6x8xf32, #tpu.memory_space<smem>>
    %84 = vector.broadcast %83 : f32 to vector<8x128xf32>
    %85 = arith.mulf %13, %84 : vector<8x128xf32>
    %86 = arith.addf %82, %85 : vector<8x128xf32>
    %c1_50 = arith.constant 1 : index
    %c7_51 = arith.constant 7 : index
    %87 = memref.load %arg2[%c1_50, %c7_51] : memref<6x8xf32, #tpu.memory_space<smem>>
    %88 = vector.broadcast %87 : f32 to vector<8x128xf32>
    %89 = arith.mulf %15, %88 : vector<8x128xf32>
    %90 = arith.addf %86, %89 : vector<8x128xf32>
    %cst_52 = arith.constant 5.000000e-01 : f32
    %91 = vector.broadcast %cst_52 : f32 to vector<8x128xf32>
    %92 = arith.mulf %91, %90 : vector<8x128xf32>
    %93 = math.tanh %92 : vector<8x128xf32>
    %cst_53 = arith.constant 5.000000e-01 : f32
    %94 = vector.broadcast %cst_53 : f32 to vector<8x128xf32>
    %95 = arith.mulf %94, %93 : vector<8x128xf32>
    %cst_54 = arith.constant 5.000000e-01 : f32
    %96 = vector.broadcast %cst_54 : f32 to vector<8x128xf32>
    %97 = arith.addf %95, %96 : vector<8x128xf32>
    %c2_55 = arith.constant 2 : index
    %c0_56 = arith.constant 0 : index
    %98 = memref.load %arg2[%c2_55, %c0_56] : memref<6x8xf32, #tpu.memory_space<smem>>
    %99 = vector.broadcast %98 : f32 to vector<8x128xf32>
    %100 = arith.mulf %1, %99 : vector<8x128xf32>
    %c2_57 = arith.constant 2 : index
    %101 = memref.load %arg3[%c2_57] : memref<6xf32, #tpu.memory_space<smem>>
    %102 = vector.broadcast %101 : f32 to vector<8x128xf32>
    %103 = arith.addf %100, %102 : vector<8x128xf32>
    %c2_58 = arith.constant 2 : index
    %c1_59 = arith.constant 1 : index
    %104 = memref.load %arg2[%c2_58, %c1_59] : memref<6x8xf32, #tpu.memory_space<smem>>
    %105 = vector.broadcast %104 : f32 to vector<8x128xf32>
    %106 = arith.mulf %3, %105 : vector<8x128xf32>
    %107 = arith.addf %103, %106 : vector<8x128xf32>
    %c2_60 = arith.constant 2 : index
    %c2_61 = arith.constant 2 : index
    %108 = memref.load %arg2[%c2_60, %c2_61] : memref<6x8xf32, #tpu.memory_space<smem>>
    %109 = vector.broadcast %108 : f32 to vector<8x128xf32>
    %110 = arith.mulf %5, %109 : vector<8x128xf32>
    %111 = arith.addf %107, %110 : vector<8x128xf32>
    %c2_62 = arith.constant 2 : index
    %c3_63 = arith.constant 3 : index
    %112 = memref.load %arg2[%c2_62, %c3_63] : memref<6x8xf32, #tpu.memory_space<smem>>
    %113 = vector.broadcast %112 : f32 to vector<8x128xf32>
    %114 = arith.mulf %7, %113 : vector<8x128xf32>
    %115 = arith.addf %111, %114 : vector<8x128xf32>
    %c2_64 = arith.constant 2 : index
    %c4_65 = arith.constant 4 : index
    %116 = memref.load %arg2[%c2_64, %c4_65] : memref<6x8xf32, #tpu.memory_space<smem>>
    %117 = vector.broadcast %116 : f32 to vector<8x128xf32>
    %118 = arith.mulf %9, %117 : vector<8x128xf32>
    %119 = arith.addf %115, %118 : vector<8x128xf32>
    %c2_66 = arith.constant 2 : index
    %c5_67 = arith.constant 5 : index
    %120 = memref.load %arg2[%c2_66, %c5_67] : memref<6x8xf32, #tpu.memory_space<smem>>
    %121 = vector.broadcast %120 : f32 to vector<8x128xf32>
    %122 = arith.mulf %11, %121 : vector<8x128xf32>
    %123 = arith.addf %119, %122 : vector<8x128xf32>
    %c2_68 = arith.constant 2 : index
    %c6_69 = arith.constant 6 : index
    %124 = memref.load %arg2[%c2_68, %c6_69] : memref<6x8xf32, #tpu.memory_space<smem>>
    %125 = vector.broadcast %124 : f32 to vector<8x128xf32>
    %126 = arith.mulf %13, %125 : vector<8x128xf32>
    %127 = arith.addf %123, %126 : vector<8x128xf32>
    %c2_70 = arith.constant 2 : index
    %c7_71 = arith.constant 7 : index
    %128 = memref.load %arg2[%c2_70, %c7_71] : memref<6x8xf32, #tpu.memory_space<smem>>
    %129 = vector.broadcast %128 : f32 to vector<8x128xf32>
    %130 = arith.mulf %15, %129 : vector<8x128xf32>
    %131 = arith.addf %127, %130 : vector<8x128xf32>
    %cst_72 = arith.constant 5.000000e-01 : f32
    %132 = vector.broadcast %cst_72 : f32 to vector<8x128xf32>
    %133 = arith.mulf %132, %131 : vector<8x128xf32>
    %134 = math.tanh %133 : vector<8x128xf32>
    %cst_73 = arith.constant 5.000000e-01 : f32
    %135 = vector.broadcast %cst_73 : f32 to vector<8x128xf32>
    %136 = arith.mulf %135, %134 : vector<8x128xf32>
    %cst_74 = arith.constant 5.000000e-01 : f32
    %137 = vector.broadcast %cst_74 : f32 to vector<8x128xf32>
    %138 = arith.addf %136, %137 : vector<8x128xf32>
    %c3_75 = arith.constant 3 : index
    %c0_76 = arith.constant 0 : index
    %139 = memref.load %arg2[%c3_75, %c0_76] : memref<6x8xf32, #tpu.memory_space<smem>>
    %140 = vector.broadcast %139 : f32 to vector<8x128xf32>
    %141 = arith.mulf %1, %140 : vector<8x128xf32>
    %c3_77 = arith.constant 3 : index
    %142 = memref.load %arg3[%c3_77] : memref<6xf32, #tpu.memory_space<smem>>
    %143 = vector.broadcast %142 : f32 to vector<8x128xf32>
    %144 = arith.addf %141, %143 : vector<8x128xf32>
    %c3_78 = arith.constant 3 : index
    %c1_79 = arith.constant 1 : index
    %145 = memref.load %arg2[%c3_78, %c1_79] : memref<6x8xf32, #tpu.memory_space<smem>>
    %146 = vector.broadcast %145 : f32 to vector<8x128xf32>
    %147 = arith.mulf %3, %146 : vector<8x128xf32>
    %148 = arith.addf %144, %147 : vector<8x128xf32>
    %c3_80 = arith.constant 3 : index
    %c2_81 = arith.constant 2 : index
    %149 = memref.load %arg2[%c3_80, %c2_81] : memref<6x8xf32, #tpu.memory_space<smem>>
    %150 = vector.broadcast %149 : f32 to vector<8x128xf32>
    %151 = arith.mulf %5, %150 : vector<8x128xf32>
    %152 = arith.addf %148, %151 : vector<8x128xf32>
    %c3_82 = arith.constant 3 : index
    %c3_83 = arith.constant 3 : index
    %153 = memref.load %arg2[%c3_82, %c3_83] : memref<6x8xf32, #tpu.memory_space<smem>>
    %154 = vector.broadcast %153 : f32 to vector<8x128xf32>
    %155 = arith.mulf %7, %154 : vector<8x128xf32>
    %156 = arith.addf %152, %155 : vector<8x128xf32>
    %c3_84 = arith.constant 3 : index
    %c4_85 = arith.constant 4 : index
    %157 = memref.load %arg2[%c3_84, %c4_85] : memref<6x8xf32, #tpu.memory_space<smem>>
    %158 = vector.broadcast %157 : f32 to vector<8x128xf32>
    %159 = arith.mulf %9, %158 : vector<8x128xf32>
    %160 = arith.addf %156, %159 : vector<8x128xf32>
    %c3_86 = arith.constant 3 : index
    %c5_87 = arith.constant 5 : index
    %161 = memref.load %arg2[%c3_86, %c5_87] : memref<6x8xf32, #tpu.memory_space<smem>>
    %162 = vector.broadcast %161 : f32 to vector<8x128xf32>
    %163 = arith.mulf %11, %162 : vector<8x128xf32>
    %164 = arith.addf %160, %163 : vector<8x128xf32>
    %c3_88 = arith.constant 3 : index
    %c6_89 = arith.constant 6 : index
    %165 = memref.load %arg2[%c3_88, %c6_89] : memref<6x8xf32, #tpu.memory_space<smem>>
    %166 = vector.broadcast %165 : f32 to vector<8x128xf32>
    %167 = arith.mulf %13, %166 : vector<8x128xf32>
    %168 = arith.addf %164, %167 : vector<8x128xf32>
    %c3_90 = arith.constant 3 : index
    %c7_91 = arith.constant 7 : index
    %169 = memref.load %arg2[%c3_90, %c7_91] : memref<6x8xf32, #tpu.memory_space<smem>>
    %170 = vector.broadcast %169 : f32 to vector<8x128xf32>
    %171 = arith.mulf %15, %170 : vector<8x128xf32>
    %172 = arith.addf %168, %171 : vector<8x128xf32>
    %cst_92 = arith.constant 5.000000e-01 : f32
    %173 = vector.broadcast %cst_92 : f32 to vector<8x128xf32>
    %174 = arith.mulf %173, %172 : vector<8x128xf32>
    %175 = math.tanh %174 : vector<8x128xf32>
    %cst_93 = arith.constant 5.000000e-01 : f32
    %176 = vector.broadcast %cst_93 : f32 to vector<8x128xf32>
    %177 = arith.mulf %176, %175 : vector<8x128xf32>
    %cst_94 = arith.constant 5.000000e-01 : f32
    %178 = vector.broadcast %cst_94 : f32 to vector<8x128xf32>
    %179 = arith.addf %177, %178 : vector<8x128xf32>
    %c4_95 = arith.constant 4 : index
    %c0_96 = arith.constant 0 : index
    %180 = memref.load %arg2[%c4_95, %c0_96] : memref<6x8xf32, #tpu.memory_space<smem>>
    %181 = vector.broadcast %180 : f32 to vector<8x128xf32>
    %182 = arith.mulf %1, %181 : vector<8x128xf32>
    %c4_97 = arith.constant 4 : index
    %183 = memref.load %arg3[%c4_97] : memref<6xf32, #tpu.memory_space<smem>>
    %184 = vector.broadcast %183 : f32 to vector<8x128xf32>
    %185 = arith.addf %182, %184 : vector<8x128xf32>
    %c4_98 = arith.constant 4 : index
    %c1_99 = arith.constant 1 : index
    %186 = memref.load %arg2[%c4_98, %c1_99] : memref<6x8xf32, #tpu.memory_space<smem>>
    %187 = vector.broadcast %186 : f32 to vector<8x128xf32>
    %188 = arith.mulf %3, %187 : vector<8x128xf32>
    %189 = arith.addf %185, %188 : vector<8x128xf32>
    %c4_100 = arith.constant 4 : index
    %c2_101 = arith.constant 2 : index
    %190 = memref.load %arg2[%c4_100, %c2_101] : memref<6x8xf32, #tpu.memory_space<smem>>
    %191 = vector.broadcast %190 : f32 to vector<8x128xf32>
    %192 = arith.mulf %5, %191 : vector<8x128xf32>
    %193 = arith.addf %189, %192 : vector<8x128xf32>
    %c4_102 = arith.constant 4 : index
    %c3_103 = arith.constant 3 : index
    %194 = memref.load %arg2[%c4_102, %c3_103] : memref<6x8xf32, #tpu.memory_space<smem>>
    %195 = vector.broadcast %194 : f32 to vector<8x128xf32>
    %196 = arith.mulf %7, %195 : vector<8x128xf32>
    %197 = arith.addf %193, %196 : vector<8x128xf32>
    %c4_104 = arith.constant 4 : index
    %c4_105 = arith.constant 4 : index
    %198 = memref.load %arg2[%c4_104, %c4_105] : memref<6x8xf32, #tpu.memory_space<smem>>
    %199 = vector.broadcast %198 : f32 to vector<8x128xf32>
    %200 = arith.mulf %9, %199 : vector<8x128xf32>
    %201 = arith.addf %197, %200 : vector<8x128xf32>
    %c4_106 = arith.constant 4 : index
    %c5_107 = arith.constant 5 : index
    %202 = memref.load %arg2[%c4_106, %c5_107] : memref<6x8xf32, #tpu.memory_space<smem>>
    %203 = vector.broadcast %202 : f32 to vector<8x128xf32>
    %204 = arith.mulf %11, %203 : vector<8x128xf32>
    %205 = arith.addf %201, %204 : vector<8x128xf32>
    %c4_108 = arith.constant 4 : index
    %c6_109 = arith.constant 6 : index
    %206 = memref.load %arg2[%c4_108, %c6_109] : memref<6x8xf32, #tpu.memory_space<smem>>
    %207 = vector.broadcast %206 : f32 to vector<8x128xf32>
    %208 = arith.mulf %13, %207 : vector<8x128xf32>
    %209 = arith.addf %205, %208 : vector<8x128xf32>
    %c4_110 = arith.constant 4 : index
    %c7_111 = arith.constant 7 : index
    %210 = memref.load %arg2[%c4_110, %c7_111] : memref<6x8xf32, #tpu.memory_space<smem>>
    %211 = vector.broadcast %210 : f32 to vector<8x128xf32>
    %212 = arith.mulf %15, %211 : vector<8x128xf32>
    %213 = arith.addf %209, %212 : vector<8x128xf32>
    %cst_112 = arith.constant 5.000000e-01 : f32
    %214 = vector.broadcast %cst_112 : f32 to vector<8x128xf32>
    %215 = arith.mulf %214, %213 : vector<8x128xf32>
    %216 = math.tanh %215 : vector<8x128xf32>
    %cst_113 = arith.constant 5.000000e-01 : f32
    %217 = vector.broadcast %cst_113 : f32 to vector<8x128xf32>
    %218 = arith.mulf %217, %216 : vector<8x128xf32>
    %cst_114 = arith.constant 5.000000e-01 : f32
    %219 = vector.broadcast %cst_114 : f32 to vector<8x128xf32>
    %220 = arith.addf %218, %219 : vector<8x128xf32>
    %c5_115 = arith.constant 5 : index
    %c0_116 = arith.constant 0 : index
    %221 = memref.load %arg2[%c5_115, %c0_116] : memref<6x8xf32, #tpu.memory_space<smem>>
    %222 = vector.broadcast %221 : f32 to vector<8x128xf32>
    %223 = arith.mulf %1, %222 : vector<8x128xf32>
    %c5_117 = arith.constant 5 : index
    %224 = memref.load %arg3[%c5_117] : memref<6xf32, #tpu.memory_space<smem>>
    %225 = vector.broadcast %224 : f32 to vector<8x128xf32>
    %226 = arith.addf %223, %225 : vector<8x128xf32>
    %c5_118 = arith.constant 5 : index
    %c1_119 = arith.constant 1 : index
    %227 = memref.load %arg2[%c5_118, %c1_119] : memref<6x8xf32, #tpu.memory_space<smem>>
    %228 = vector.broadcast %227 : f32 to vector<8x128xf32>
    %229 = arith.mulf %3, %228 : vector<8x128xf32>
    %230 = arith.addf %226, %229 : vector<8x128xf32>
    %c5_120 = arith.constant 5 : index
    %c2_121 = arith.constant 2 : index
    %231 = memref.load %arg2[%c5_120, %c2_121] : memref<6x8xf32, #tpu.memory_space<smem>>
    %232 = vector.broadcast %231 : f32 to vector<8x128xf32>
    %233 = arith.mulf %5, %232 : vector<8x128xf32>
    %234 = arith.addf %230, %233 : vector<8x128xf32>
    %c5_122 = arith.constant 5 : index
    %c3_123 = arith.constant 3 : index
    %235 = memref.load %arg2[%c5_122, %c3_123] : memref<6x8xf32, #tpu.memory_space<smem>>
    %236 = vector.broadcast %235 : f32 to vector<8x128xf32>
    %237 = arith.mulf %7, %236 : vector<8x128xf32>
    %238 = arith.addf %234, %237 : vector<8x128xf32>
    %c5_124 = arith.constant 5 : index
    %c4_125 = arith.constant 4 : index
    %239 = memref.load %arg2[%c5_124, %c4_125] : memref<6x8xf32, #tpu.memory_space<smem>>
    %240 = vector.broadcast %239 : f32 to vector<8x128xf32>
    %241 = arith.mulf %9, %240 : vector<8x128xf32>
    %242 = arith.addf %238, %241 : vector<8x128xf32>
    %c5_126 = arith.constant 5 : index
    %c5_127 = arith.constant 5 : index
    %243 = memref.load %arg2[%c5_126, %c5_127] : memref<6x8xf32, #tpu.memory_space<smem>>
    %244 = vector.broadcast %243 : f32 to vector<8x128xf32>
    %245 = arith.mulf %11, %244 : vector<8x128xf32>
    %246 = arith.addf %242, %245 : vector<8x128xf32>
    %c5_128 = arith.constant 5 : index
    %c6_129 = arith.constant 6 : index
    %247 = memref.load %arg2[%c5_128, %c6_129] : memref<6x8xf32, #tpu.memory_space<smem>>
    %248 = vector.broadcast %247 : f32 to vector<8x128xf32>
    %249 = arith.mulf %13, %248 : vector<8x128xf32>
    %250 = arith.addf %246, %249 : vector<8x128xf32>
    %c5_130 = arith.constant 5 : index
    %c7_131 = arith.constant 7 : index
    %251 = memref.load %arg2[%c5_130, %c7_131] : memref<6x8xf32, #tpu.memory_space<smem>>
    %252 = vector.broadcast %251 : f32 to vector<8x128xf32>
    %253 = arith.mulf %15, %252 : vector<8x128xf32>
    %254 = arith.addf %250, %253 : vector<8x128xf32>
    %cst_132 = arith.constant 5.000000e-01 : f32
    %255 = vector.broadcast %cst_132 : f32 to vector<8x128xf32>
    %256 = arith.mulf %255, %254 : vector<8x128xf32>
    %257 = math.tanh %256 : vector<8x128xf32>
    %cst_133 = arith.constant 5.000000e-01 : f32
    %258 = vector.broadcast %cst_133 : f32 to vector<8x128xf32>
    %259 = arith.mulf %258, %257 : vector<8x128xf32>
    %cst_134 = arith.constant 5.000000e-01 : f32
    %260 = vector.broadcast %cst_134 : f32 to vector<8x128xf32>
    %261 = arith.addf %259, %260 : vector<8x128xf32>
    %c0_135 = arith.constant 0 : index
    %c0_136 = arith.constant 0 : index
    %262 = memref.load %arg4[%c0_135, %c0_136] : memref<4x6xf32, #tpu.memory_space<smem>>
    %263 = vector.broadcast %262 : f32 to vector<8x128xf32>
    %264 = arith.mulf %56, %263 : vector<8x128xf32>
    %c0_137 = arith.constant 0 : index
    %265 = memref.load %arg5[%c0_137] : memref<4xf32, #tpu.memory_space<smem>>
    %266 = vector.broadcast %265 : f32 to vector<8x128xf32>
    %267 = arith.addf %264, %266 : vector<8x128xf32>
    %c0_138 = arith.constant 0 : index
    %c1_139 = arith.constant 1 : index
    %268 = memref.load %arg4[%c0_138, %c1_139] : memref<4x6xf32, #tpu.memory_space<smem>>
    %269 = vector.broadcast %268 : f32 to vector<8x128xf32>
    %270 = arith.mulf %97, %269 : vector<8x128xf32>
    %271 = arith.addf %267, %270 : vector<8x128xf32>
    %c0_140 = arith.constant 0 : index
    %c2_141 = arith.constant 2 : index
    %272 = memref.load %arg4[%c0_140, %c2_141] : memref<4x6xf32, #tpu.memory_space<smem>>
    %273 = vector.broadcast %272 : f32 to vector<8x128xf32>
    %274 = arith.mulf %138, %273 : vector<8x128xf32>
    %275 = arith.addf %271, %274 : vector<8x128xf32>
    %c0_142 = arith.constant 0 : index
    %c3_143 = arith.constant 3 : index
    %276 = memref.load %arg4[%c0_142, %c3_143] : memref<4x6xf32, #tpu.memory_space<smem>>
    %277 = vector.broadcast %276 : f32 to vector<8x128xf32>
    %278 = arith.mulf %179, %277 : vector<8x128xf32>
    %279 = arith.addf %275, %278 : vector<8x128xf32>
    %c0_144 = arith.constant 0 : index
    %c4_145 = arith.constant 4 : index
    %280 = memref.load %arg4[%c0_144, %c4_145] : memref<4x6xf32, #tpu.memory_space<smem>>
    %281 = vector.broadcast %280 : f32 to vector<8x128xf32>
    %282 = arith.mulf %220, %281 : vector<8x128xf32>
    %283 = arith.addf %279, %282 : vector<8x128xf32>
    %c0_146 = arith.constant 0 : index
    %c5_147 = arith.constant 5 : index
    %284 = memref.load %arg4[%c0_146, %c5_147] : memref<4x6xf32, #tpu.memory_space<smem>>
    %285 = vector.broadcast %284 : f32 to vector<8x128xf32>
    %286 = arith.mulf %261, %285 : vector<8x128xf32>
    %287 = arith.addf %283, %286 : vector<8x128xf32>
    %cst_148 = arith.constant 5.000000e-01 : f32
    %288 = vector.broadcast %cst_148 : f32 to vector<8x128xf32>
    %289 = arith.mulf %288, %287 : vector<8x128xf32>
    %290 = math.tanh %289 : vector<8x128xf32>
    %cst_149 = arith.constant 5.000000e-01 : f32
    %291 = vector.broadcast %cst_149 : f32 to vector<8x128xf32>
    %292 = arith.mulf %291, %290 : vector<8x128xf32>
    %cst_150 = arith.constant 5.000000e-01 : f32
    %293 = vector.broadcast %cst_150 : f32 to vector<8x128xf32>
    %294 = arith.addf %292, %293 : vector<8x128xf32>
    %c1_151 = arith.constant 1 : index
    %c0_152 = arith.constant 0 : index
    %295 = memref.load %arg4[%c1_151, %c0_152] : memref<4x6xf32, #tpu.memory_space<smem>>
    %296 = vector.broadcast %295 : f32 to vector<8x128xf32>
    %297 = arith.mulf %56, %296 : vector<8x128xf32>
    %c1_153 = arith.constant 1 : index
    %298 = memref.load %arg5[%c1_153] : memref<4xf32, #tpu.memory_space<smem>>
    %299 = vector.broadcast %298 : f32 to vector<8x128xf32>
    %300 = arith.addf %297, %299 : vector<8x128xf32>
    %c1_154 = arith.constant 1 : index
    %c1_155 = arith.constant 1 : index
    %301 = memref.load %arg4[%c1_154, %c1_155] : memref<4x6xf32, #tpu.memory_space<smem>>
    %302 = vector.broadcast %301 : f32 to vector<8x128xf32>
    %303 = arith.mulf %97, %302 : vector<8x128xf32>
    %304 = arith.addf %300, %303 : vector<8x128xf32>
    %c1_156 = arith.constant 1 : index
    %c2_157 = arith.constant 2 : index
    %305 = memref.load %arg4[%c1_156, %c2_157] : memref<4x6xf32, #tpu.memory_space<smem>>
    %306 = vector.broadcast %305 : f32 to vector<8x128xf32>
    %307 = arith.mulf %138, %306 : vector<8x128xf32>
    %308 = arith.addf %304, %307 : vector<8x128xf32>
    %c1_158 = arith.constant 1 : index
    %c3_159 = arith.constant 3 : index
    %309 = memref.load %arg4[%c1_158, %c3_159] : memref<4x6xf32, #tpu.memory_space<smem>>
    %310 = vector.broadcast %309 : f32 to vector<8x128xf32>
    %311 = arith.mulf %179, %310 : vector<8x128xf32>
    %312 = arith.addf %308, %311 : vector<8x128xf32>
    %c1_160 = arith.constant 1 : index
    %c4_161 = arith.constant 4 : index
    %313 = memref.load %arg4[%c1_160, %c4_161] : memref<4x6xf32, #tpu.memory_space<smem>>
    %314 = vector.broadcast %313 : f32 to vector<8x128xf32>
    %315 = arith.mulf %220, %314 : vector<8x128xf32>
    %316 = arith.addf %312, %315 : vector<8x128xf32>
    %c1_162 = arith.constant 1 : index
    %c5_163 = arith.constant 5 : index
    %317 = memref.load %arg4[%c1_162, %c5_163] : memref<4x6xf32, #tpu.memory_space<smem>>
    %318 = vector.broadcast %317 : f32 to vector<8x128xf32>
    %319 = arith.mulf %261, %318 : vector<8x128xf32>
    %320 = arith.addf %316, %319 : vector<8x128xf32>
    %cst_164 = arith.constant 5.000000e-01 : f32
    %321 = vector.broadcast %cst_164 : f32 to vector<8x128xf32>
    %322 = arith.mulf %321, %320 : vector<8x128xf32>
    %323 = math.tanh %322 : vector<8x128xf32>
    %cst_165 = arith.constant 5.000000e-01 : f32
    %324 = vector.broadcast %cst_165 : f32 to vector<8x128xf32>
    %325 = arith.mulf %324, %323 : vector<8x128xf32>
    %cst_166 = arith.constant 5.000000e-01 : f32
    %326 = vector.broadcast %cst_166 : f32 to vector<8x128xf32>
    %327 = arith.addf %325, %326 : vector<8x128xf32>
    %c2_167 = arith.constant 2 : index
    %c0_168 = arith.constant 0 : index
    %328 = memref.load %arg4[%c2_167, %c0_168] : memref<4x6xf32, #tpu.memory_space<smem>>
    %329 = vector.broadcast %328 : f32 to vector<8x128xf32>
    %330 = arith.mulf %56, %329 : vector<8x128xf32>
    %c2_169 = arith.constant 2 : index
    %331 = memref.load %arg5[%c2_169] : memref<4xf32, #tpu.memory_space<smem>>
    %332 = vector.broadcast %331 : f32 to vector<8x128xf32>
    %333 = arith.addf %330, %332 : vector<8x128xf32>
    %c2_170 = arith.constant 2 : index
    %c1_171 = arith.constant 1 : index
    %334 = memref.load %arg4[%c2_170, %c1_171] : memref<4x6xf32, #tpu.memory_space<smem>>
    %335 = vector.broadcast %334 : f32 to vector<8x128xf32>
    %336 = arith.mulf %97, %335 : vector<8x128xf32>
    %337 = arith.addf %333, %336 : vector<8x128xf32>
    %c2_172 = arith.constant 2 : index
    %c2_173 = arith.constant 2 : index
    %338 = memref.load %arg4[%c2_172, %c2_173] : memref<4x6xf32, #tpu.memory_space<smem>>
    %339 = vector.broadcast %338 : f32 to vector<8x128xf32>
    %340 = arith.mulf %138, %339 : vector<8x128xf32>
    %341 = arith.addf %337, %340 : vector<8x128xf32>
    %c2_174 = arith.constant 2 : index
    %c3_175 = arith.constant 3 : index
    %342 = memref.load %arg4[%c2_174, %c3_175] : memref<4x6xf32, #tpu.memory_space<smem>>
    %343 = vector.broadcast %342 : f32 to vector<8x128xf32>
    %344 = arith.mulf %179, %343 : vector<8x128xf32>
    %345 = arith.addf %341, %344 : vector<8x128xf32>
    %c2_176 = arith.constant 2 : index
    %c4_177 = arith.constant 4 : index
    %346 = memref.load %arg4[%c2_176, %c4_177] : memref<4x6xf32, #tpu.memory_space<smem>>
    %347 = vector.broadcast %346 : f32 to vector<8x128xf32>
    %348 = arith.mulf %220, %347 : vector<8x128xf32>
    %349 = arith.addf %345, %348 : vector<8x128xf32>
    %c2_178 = arith.constant 2 : index
    %c5_179 = arith.constant 5 : index
    %350 = memref.load %arg4[%c2_178, %c5_179] : memref<4x6xf32, #tpu.memory_space<smem>>
    %351 = vector.broadcast %350 : f32 to vector<8x128xf32>
    %352 = arith.mulf %261, %351 : vector<8x128xf32>
    %353 = arith.addf %349, %352 : vector<8x128xf32>
    %cst_180 = arith.constant 5.000000e-01 : f32
    %354 = vector.broadcast %cst_180 : f32 to vector<8x128xf32>
    %355 = arith.mulf %354, %353 : vector<8x128xf32>
    %356 = math.tanh %355 : vector<8x128xf32>
    %cst_181 = arith.constant 5.000000e-01 : f32
    %357 = vector.broadcast %cst_181 : f32 to vector<8x128xf32>
    %358 = arith.mulf %357, %356 : vector<8x128xf32>
    %cst_182 = arith.constant 5.000000e-01 : f32
    %359 = vector.broadcast %cst_182 : f32 to vector<8x128xf32>
    %360 = arith.addf %358, %359 : vector<8x128xf32>
    %c3_183 = arith.constant 3 : index
    %c0_184 = arith.constant 0 : index
    %361 = memref.load %arg4[%c3_183, %c0_184] : memref<4x6xf32, #tpu.memory_space<smem>>
    %362 = vector.broadcast %361 : f32 to vector<8x128xf32>
    %363 = arith.mulf %56, %362 : vector<8x128xf32>
    %c3_185 = arith.constant 3 : index
    %364 = memref.load %arg5[%c3_185] : memref<4xf32, #tpu.memory_space<smem>>
    %365 = vector.broadcast %364 : f32 to vector<8x128xf32>
    %366 = arith.addf %363, %365 : vector<8x128xf32>
    %c3_186 = arith.constant 3 : index
    %c1_187 = arith.constant 1 : index
    %367 = memref.load %arg4[%c3_186, %c1_187] : memref<4x6xf32, #tpu.memory_space<smem>>
    %368 = vector.broadcast %367 : f32 to vector<8x128xf32>
    %369 = arith.mulf %97, %368 : vector<8x128xf32>
    %370 = arith.addf %366, %369 : vector<8x128xf32>
    %c3_188 = arith.constant 3 : index
    %c2_189 = arith.constant 2 : index
    %371 = memref.load %arg4[%c3_188, %c2_189] : memref<4x6xf32, #tpu.memory_space<smem>>
    %372 = vector.broadcast %371 : f32 to vector<8x128xf32>
    %373 = arith.mulf %138, %372 : vector<8x128xf32>
    %374 = arith.addf %370, %373 : vector<8x128xf32>
    %c3_190 = arith.constant 3 : index
    %c3_191 = arith.constant 3 : index
    %375 = memref.load %arg4[%c3_190, %c3_191] : memref<4x6xf32, #tpu.memory_space<smem>>
    %376 = vector.broadcast %375 : f32 to vector<8x128xf32>
    %377 = arith.mulf %179, %376 : vector<8x128xf32>
    %378 = arith.addf %374, %377 : vector<8x128xf32>
    %c3_192 = arith.constant 3 : index
    %c4_193 = arith.constant 4 : index
    %379 = memref.load %arg4[%c3_192, %c4_193] : memref<4x6xf32, #tpu.memory_space<smem>>
    %380 = vector.broadcast %379 : f32 to vector<8x128xf32>
    %381 = arith.mulf %220, %380 : vector<8x128xf32>
    %382 = arith.addf %378, %381 : vector<8x128xf32>
    %c3_194 = arith.constant 3 : index
    %c5_195 = arith.constant 5 : index
    %383 = memref.load %arg4[%c3_194, %c5_195] : memref<4x6xf32, #tpu.memory_space<smem>>
    %384 = vector.broadcast %383 : f32 to vector<8x128xf32>
    %385 = arith.mulf %261, %384 : vector<8x128xf32>
    %386 = arith.addf %382, %385 : vector<8x128xf32>
    %cst_196 = arith.constant 5.000000e-01 : f32
    %387 = vector.broadcast %cst_196 : f32 to vector<8x128xf32>
    %388 = arith.mulf %387, %386 : vector<8x128xf32>
    %389 = math.tanh %388 : vector<8x128xf32>
    %cst_197 = arith.constant 5.000000e-01 : f32
    %390 = vector.broadcast %cst_197 : f32 to vector<8x128xf32>
    %391 = arith.mulf %390, %389 : vector<8x128xf32>
    %cst_198 = arith.constant 5.000000e-01 : f32
    %392 = vector.broadcast %cst_198 : f32 to vector<8x128xf32>
    %393 = arith.addf %391, %392 : vector<8x128xf32>
    %c0_199 = arith.constant 0 : index
    %c0_200 = arith.constant 0 : index
    %394 = memref.load %arg6[%c0_199, %c0_200] : memref<1x4xf32, #tpu.memory_space<smem>>
    %395 = vector.broadcast %394 : f32 to vector<8x128xf32>
    %396 = arith.mulf %294, %395 : vector<8x128xf32>
    %c0_201 = arith.constant 0 : index
    %397 = memref.load %arg7[%c0_201] : memref<1xf32, #tpu.memory_space<smem>>
    %398 = vector.broadcast %397 : f32 to vector<8x128xf32>
    %399 = arith.addf %396, %398 : vector<8x128xf32>
    %c0_202 = arith.constant 0 : index
    %c1_203 = arith.constant 1 : index
    %400 = memref.load %arg6[%c0_202, %c1_203] : memref<1x4xf32, #tpu.memory_space<smem>>
    %401 = vector.broadcast %400 : f32 to vector<8x128xf32>
    %402 = arith.mulf %327, %401 : vector<8x128xf32>
    %403 = arith.addf %399, %402 : vector<8x128xf32>
    %c0_204 = arith.constant 0 : index
    %c2_205 = arith.constant 2 : index
    %404 = memref.load %arg6[%c0_204, %c2_205] : memref<1x4xf32, #tpu.memory_space<smem>>
    %405 = vector.broadcast %404 : f32 to vector<8x128xf32>
    %406 = arith.mulf %360, %405 : vector<8x128xf32>
    %407 = arith.addf %403, %406 : vector<8x128xf32>
    %c0_206 = arith.constant 0 : index
    %c3_207 = arith.constant 3 : index
    %408 = memref.load %arg6[%c0_206, %c3_207] : memref<1x4xf32, #tpu.memory_space<smem>>
    %409 = vector.broadcast %408 : f32 to vector<8x128xf32>
    %410 = arith.mulf %393, %409 : vector<8x128xf32>
    %411 = arith.addf %407, %410 : vector<8x128xf32>
    %cst_208 = arith.constant 5.000000e-01 : f32
    %412 = vector.broadcast %cst_208 : f32 to vector<8x128xf32>
    %413 = arith.mulf %412, %411 : vector<8x128xf32>
    %414 = math.tanh %413 : vector<8x128xf32>
    %cst_209 = arith.constant 5.000000e-01 : f32
    %415 = vector.broadcast %cst_209 : f32 to vector<8x128xf32>
    %416 = arith.mulf %415, %414 : vector<8x128xf32>
    %cst_210 = arith.constant 5.000000e-01 : f32
    %417 = vector.broadcast %cst_210 : f32 to vector<8x128xf32>
    %418 = arith.addf %416, %417 : vector<8x128xf32>
    %c0_211 = arith.constant 0 : index
    %c0_212 = arith.constant 0 : index
    %419 = vector.load %arg8[%c0_211, %c0_212] : memref<8x128xf32, #tpu.memory_space<vmem>>, vector<8x128xf32>
    tpu.vector_store %arg8[%c0_211, %c0_212], %418 {strides = array<i32>} : memref<8x128xf32, #tpu.memory_space<vmem>>, vector<8x128xf32>,
    return
  }
  func.func @transform_0(%arg0: i32) -> (i32, i32, i32) {
    %c0_i32 = arith.constant 0 : i32
    %c0_i32_0 = arith.constant 0 : i32
    %c0_i32_1 = arith.constant 0 : i32
    return %c0_i32, %arg0, %c0_i32_0 : i32, i32, i32
  }
  func.func @transform_1(%arg0: i32) -> (i32, i32) {
    %c0_i32 = arith.constant 0 : i32
    %c0_i32_0 = arith.constant 0 : i32
    %c0_i32_1 = arith.constant 0 : i32
    return %c0_i32, %c0_i32_0 : i32, i32
  }
  func.func @transform_2(%arg0: i32) -> i32 {
    %c0_i32 = arith.constant 0 : i32
    %c0_i32_0 = arith.constant 0 : i32
    return %c0_i32 : i32
  }
  func.func @transform_3(%arg0: i32) -> (i32, i32) {
    %c0_i32 = arith.constant 0 : i32
    %c0_i32_0 = arith.constant 0 : i32
    %c0_i32_1 = arith.constant 0 : i32
    return %c0_i32, %c0_i32_0 : i32, i32
  }
  func.func @transform_4(%arg0: i32) -> i32 {
    %c0_i32 = arith.constant 0 : i32
    %c0_i32_0 = arith.constant 0 : i32
    return %c0_i32 : i32
  }
  func.func @transform_5(%arg0: i32) -> (i32, i32) {
    %c0_i32 = arith.constant 0 : i32
    %c0_i32_0 = arith.constant 0 : i32
    %c0_i32_1 = arith.constant 0 : i32
    return %c0_i32, %c0_i32_0 : i32, i32
  }
  func.func @transform_6(%arg0: i32) -> i32 {
    %c0_i32 = arith.constant 0 : i32
    %c0_i32_0 = arith.constant 0 : i32
    return %c0_i32 : i32
  }
  func.func @transform_7(%arg0: i32) -> (i32, i32) {
    %c0_i32 = arith.constant 0 : i32
    %c0_i32_0 = arith.constant 0 : i32
    return %arg0, %c0_i32 : i32, i32
  }
}

</mosaic_0001>

<llo_original>
// kernel: titanic_mlp.1
$region0: #{titanic_mlp.1}
  #allocation0 [shape = 'u32[]', space=smem, size = 0x4, offset = 0x4, fixed_abs, tag = 'smem constant byte address 0x4 - core index']
  #allocation1 [shape = 'u32[144,128]{1,0:T(1,128)}', space=vmem, size = 0x12000, scoped, tag = 'internal scratch']
  #allocation2 [shape = 'f32[1]{0:T(128)S(6)}', space=smem, size = 0x200, scoped, tag = 'scoped memory for titanic_mlp.1']
  %s0 = inlined_call_operand.vmem [shape: f32[8,24,128], index: 0, kind: input, shape index: {}]
  %s1 = inlined_call_operand.vmem [shape: f32[6,8], index: 1, kind: input, shape index: {}]
  %s2 = inlined_call_operand.vmem [shape: f32[6], index: 2, kind: input, shape index: {}]
  %s3 = inlined_call_operand.vmem [shape: f32[4,6], index: 3, kind: input, shape index: {}]
  %s4 = inlined_call_operand.vmem [shape: f32[4], index: 4, kind: input, shape index: {}]
  %s5 = inlined_call_operand.vmem [shape: f32[1,4], index: 5, kind: input, shape index: {}]
  %s6 = inlined_call_operand.<no memory space> [shape: f32[1], index: 6, kind: input, shape index: {}]
  %s7 = inlined_call_operand.vmem [shape: f32[24,128], index: 7, kind: output, shape index: {}]
  %s8 = sld [smem:[#allocation0]]
  $region119: #{titanic_mlp.1} parent=0
    _
  %s10 = ssub.s32 1, %s8
  %s11 = scalar_select 0, %s10, %s8
  %12 = sst [smem:[#allocation2]] %s6
  $region1: #{titanic_mlp.1} parent=0
    #allocation3 [shape = 'u8[65536]{0}', space=vmem, size = 0x10000, scoped, tag = 'input window, operand 0']
    #allocation4 [shape = 'u8[4096]{0}', space=smem, size = 0x1000, scoped, tag = 'input window, operand 1, single buffered']
    #allocation5 [shape = 's32[2]{0}', space=sflag, size = 0x8, scoped, tag = 'scoped memory for titanic_mlp.1']
    #allocation6 [shape = 'u8[512]{0}', space=smem, size = 0x200, scoped, tag = 'input window, operand 2, single buffered']
    #allocation7 [shape = 's32[1]{0}', space=sflag, size = 0x4, scoped, tag = 'scoped memory for titanic_mlp.1']
    #allocation8 [shape = 'u8[2048]{0}', space=smem, size = 0x800, scoped, tag = 'input window, operand 3, single buffered']
    #allocation9 [shape = 'u8[512]{0}', space=smem, size = 0x200, scoped, tag = 'input window, operand 4, single buffered']
    #allocation10 [shape = 's32[1]{0}', space=sflag, size = 0x4, scoped, tag = 'scoped memory for titanic_mlp.1']
    #allocation11 [shape = 'u8[512]{0}', space=smem, size = 0x200, scoped, tag = 'input window, operand 5, single buffered']
    %13 = vsyncpa [#allocation5], 0
    %14 = vsyncpa [#allocation7], 0
    %15 = vsyncpa [#allocation10], 0
    loop: start=0, step=1, limit=5
    $region2: #{titanic_mlp.1} parent=1 // loop_pre_header
      _
    $region3: #{titanic_mlp.1} parent=1 // loop_header
      %s17 = sphi 0, %s21
      %p18 = scmp.ge.s32.totalorder %s17, 5
      %s27 = sphi 0, %s29
      %s30 = sphi 0, %s27
      %s31 = sphi 0, %s30
      %s47 = sphi 0, %s31
      %s51 = sphi 0, %s51
      %s53 = sphi 0, %s51
      %s54 = sphi 0, %s53
      %s68 = sphi 0, %s54
      %s72 = sphi 0, %s72
      %s74 = sphi 0, %s72
      %s75 = sphi 0, %s74
      %s89 = sphi 0, %s75
      %s93 = sphi 0, %s93
      %s95 = sphi 0, %s93
      %s96 = sphi 0, %s95
      %s110 = sphi 0, %s96
      %s114 = sphi 0, %s114
      %s116 = sphi 0, %s114
      %s117 = sphi 0, %s116
      %s131 = sphi 0, %s117
      %s135 = sphi 0, %s135
      %s137 = sphi 0, %s135
      %s138 = sphi 0, %s137
      %s152 = sphi 0, %s138
      %s156 = sphi 0, %s156
      %s158 = sphi 0, %s156
      %s159 = sphi 0, %s158
      %s173 = sphi 0, %s159
      %s179 = sphi 0, %s181
      %s182 = sphi 0, %s179
      %s183 = sphi 0, %s182
      %s199 = sphi 0, %s183
    $region4: #{titanic_mlp.1} parent=1 // loop_header_branch
      %20 = sbr.rel (%p18) target = $region8
    $region5: #{titanic_mlp.1} parent=1 // loop_body
      %s22 = ssub.s32 %s17, 1
      %s23 = ssub.s32 %s17, 2
      %s24 = sadd.s32 %s17, 1
      %s25 = ssub.s32 %s17, %s24
      %p26 = scmp.eq.s32.totalorder %s25, 0
      %s28 = sadd.s32 %s27, 1
      %s29 = scalar_select %p26, %s27, %s28
      %p32 = pneg %p26
      %p33 = scmp.eq.s32.totalorder %s17, 2
      %p34 = por %p32, %p33
      %p35 = scmp.ne.s32.totalorder %s27, %s30
      %p36 = scmp.eq.s32.totalorder %s17, 0
      %p37 = por %p35, %p36
      %p38 = scmp.ne.s32.totalorder %s27, %s30
      %p39 = scmp.eq.s32.totalorder %s22, 2
      %p40 = por %p38, %p39
      %p41 = scmp.ne.s32.totalorder %s30, %s31
      %p42 = scmp.eq.s32.totalorder %s22, 0
      %p43 = por %p41, %p42
      %p44 = scmp.ne.s32.totalorder %s30, %s31
      %p45 = scmp.eq.s32.totalorder %s23, 2
      %p46 = por %p44, %p45
      %p48 = scmp.ne.s32.totalorder %s31, %s47
      %p49 = scmp.eq.s32.totalorder %s23, 0
      %p50 = por %p48, %p49
      %s52 = sadd.s32 %s51, 1
      %p55 = scmp.eq.s32.totalorder %s17, 2
      %p56 = scmp.ne.s32.totalorder %s51, %s53
      %p57 = scmp.eq.s32.totalorder %s17, 0
      %p58 = por %p56, %p57
      %p59 = scmp.ne.s32.totalorder %s51, %s53
      %p60 = scmp.eq.s32.totalorder %s22, 2
      %p61 = por %p59, %p60
      %p62 = scmp.ne.s32.totalorder %s53, %s54
      %p63 = scmp.eq.s32.totalorder %s22, 0
      %p64 = por %p62, %p63
      %p65 = scmp.ne.s32.totalorder %s53, %s54
      %p66 = scmp.eq.s32.totalorder %s23, 2
      %p67 = por %p65, %p66
      %p69 = scmp.ne.s32.totalorder %s54, %s68
      %p70 = scmp.eq.s32.totalorder %s23, 0
      %p71 = por %p69, %p70
      %s73 = sadd.s32 %s72, 1
      %p76 = scmp.eq.s32.totalorder %s17, 2
      %p77 = scmp.ne.s32.totalorder %s72, %s74
      %p78 = scmp.eq.s32.totalorder %s17, 0
      %p79 = por %p77, %p78
      %p80 = scmp.ne.s32.totalorder %s72, %s74
      %p81 = scmp.eq.s32.totalorder %s22, 2
      %p82 = por %p80, %p81
      %p83 = scmp.ne.s32.totalorder %s74, %s75
      %p84 = scmp.eq.s32.totalorder %s22, 0
      %p85 = por %p83, %p84
      %p86 = scmp.ne.s32.totalorder %s74, %s75
      %p87 = scmp.eq.s32.totalorder %s23, 2
      %p88 = por %p86, %p87
      %p90 = scmp.ne.s32.totalorder %s75, %s89
      %p91 = scmp.eq.s32.totalorder %s23, 0
      %p92 = por %p90, %p91
      %s94 = sadd.s32 %s93, 1
      %p97 = scmp.eq.s32.totalorder %s17, 2
      %p98 = scmp.ne.s32.totalorder %s93, %s95
      %p99 = scmp.eq.s32.totalorder %s17, 0
      %p100 = por %p98, %p99
      %p101 = scmp.ne.s32.totalorder %s93, %s95
      %p102 = scmp.eq.s32.totalorder %s22, 2
      %p103 = por %p101, %p102
      %p104 = scmp.ne.s32.totalorder %s95, %s96
      %p105 = scmp.eq.s32.totalorder %s22, 0
      %p106 = por %p104, %p105
      %p107 = scmp.ne.s32.totalorder %s95, %s96
      %p108 = scmp.eq.s32.totalorder %s23, 2
      %p109 = por %p107, %p108
      %p111 = scmp.ne.s32.totalorder %s96, %s110
      %p112 = scmp.eq.s32.totalorder %s23, 0
      %p113 = por %p111, %p112
      %s115 = sadd.s32 %s114, 1
      %p118 = scmp.eq.s32.totalorder %s17, 2
      %p119 = scmp.ne.s32.totalorder %s114, %s116
      %p120 = scmp.eq.s32.totalorder %s17, 0
      %p121 = por %p119, %p120
      %p122 = scmp.ne.s32.totalorder %s114, %s116
      %p123 = scmp.eq.s32.totalorder %s22, 2
      %p124 = por %p122, %p123
      %p125 = scmp.ne.s32.totalorder %s116, %s117
      %p126 = scmp.eq.s32.totalorder %s22, 0
      %p127 = por %p125, %p126
      %p128 = scmp.ne.s32.totalorder %s116, %s117
      %p129 = scmp.eq.s32.totalorder %s23, 2
      %p130 = por %p128, %p129
      %p132 = scmp.ne.s32.totalorder %s117, %s131
      %p133 = scmp.eq.s32.totalorder %s23, 0
      %p134 = por %p132, %p133
      %s136 = sadd.s32 %s135, 1
      %p139 = scmp.eq.s32.totalorder %s17, 2
      %p140 = scmp.ne.s32.totalorder %s135, %s137
      %p141 = scmp.eq.s32.totalorder %s17, 0
      %p142 = por %p140, %p141
      %p143 = scmp.ne.s32.totalorder %s135, %s137
      %p144 = scmp.eq.s32.totalorder %s22, 2
      %p145 = por %p143, %p144
      %p146 = scmp.ne.s32.totalorder %s137, %s138
      %p147 = scmp.eq.s32.totalorder %s22, 0
      %p148 = por %p146, %p147
      %p149 = scmp.ne.s32.totalorder %s137, %s138
      %p150 = scmp.eq.s32.totalorder %s23, 2
      %p151 = por %p149, %p150
      %p153 = scmp.ne.s32.totalorder %s138, %s152
      %p154 = scmp.eq.s32.totalorder %s23, 0
      %p155 = por %p153, %p154
      %s157 = sadd.s32 %s156, 1
      %p160 = scmp.eq.s32.totalorder %s17, 2
      %p161 = scmp.ne.s32.totalorder %s156, %s158
      %p162 = scmp.eq.s32.totalorder %s17, 0
      %p163 = por %p161, %p162
      %p164 = scmp.ne.s32.totalorder %s156, %s158
      %p165 = scmp.eq.s32.totalorder %s22, 2
      %p166 = por %p164, %p165
      %p167 = scmp.ne.s32.totalorder %s158, %s159
      %p168 = scmp.eq.s32.totalorder %s22, 0
      %p169 = por %p167, %p168
      %p170 = scmp.ne.s32.totalorder %s158, %s159
      %p171 = scmp.eq.s32.totalorder %s23, 2
      %p172 = por %p170, %p171
      %p174 = scmp.ne.s32.totalorder %s159, %s173
      %p175 = scmp.eq.s32.totalorder %s23, 0
      %p176 = por %p174, %p175
      %s177 = ssub.s32 %s17, %s24
      %p178 = scmp.eq.s32.totalorder %s177, 0
      %s180 = sadd.s32 %s179, 1
      %s181 = scalar_select %p178, %s179, %s180
      %p184 = pneg %p178
      %p185 = scmp.eq.s32.totalorder %s17, 2
      %p186 = por %p184, %p185
      %p187 = scmp.ne.s32.totalorder %s179, %s182
      %p188 = scmp.eq.s32.totalorder %s17, 0
      %p189 = por %p187, %p188
      %p190 = scmp.ne.s32.totalorder %s179, %s182
      %p191 = scmp.eq.s32.totalorder %s22, 2
      %p192 = por %p190, %p191
      %p193 = scmp.ne.s32.totalorder %s182, %s183
      %p194 = scmp.eq.s32.totalorder %s22, 0
      %p195 = por %p193, %p194
      %p196 = scmp.ne.s32.totalorder %s182, %s183
      %p197 = scmp.eq.s32.totalorder %s23, 2
      %p198 = por %p196, %p197
      %p200 = scmp.ne.s32.totalorder %s183, %s199
      %p201 = scmp.eq.s32.totalorder %s23, 0
      %p202 = por %p200, %p201
      %p203 = scmp.le.s32.totalorder 1, %s17
      %p204 = scmp.lt.s32.totalorder %s17, 4
      %p205 = pnand %p203, %p204
      %p206 = pneg %p205
      // Predicated region
      $region9: #{titanic_mlp.1} parent=5 // pred_check
        _
      $region10: #{titanic_mlp.1} parent=5 // pred_check_branch
        %208 = sbr.rel (%p205) target = $region12
      $region11: #{titanic_mlp.1} parent=5 // pred_region
        %s209 = ssub.s32 %s17, 1
        // Predicated region
        $region13: #{titanic_mlp.1} parent=11 // pred_check
          %p210 = pneg %p64
        $region14: #{titanic_mlp.1} parent=11 // pred_check_branch
          %212 = sbr.rel (%p210) target = $region16
        $region15: #{titanic_mlp.1} parent=11 // pred_region
          %s214 = ssub.s32 128, 128
          %215 = vsyncadd [#allocation5], %s214
          %s217 = sshll.u32 %s1, 4
          %s218 = int_to_ptr.vmem [resolvable:$true] %s217
          %220 = dma.vmem_to_smem %s218, 128, [#allocation4], [#allocation5]
        $region16: #{titanic_mlp.1} parent=11 // pred_fallthru
          _
        // Predicated region
        $region17: #{titanic_mlp.1} parent=11 // pred_check
          %p221 = pneg %p85
        $region18: #{titanic_mlp.1} parent=11 // pred_check_branch
          %223 = sbr.rel (%p221) target = $region20
        $region19: #{titanic_mlp.1} parent=11 // pred_region
          %s225 = ssub.s32 16, 16
          %226 = vsyncadd [#allocation7], %s225
          %s228 = sshll.u32 %s2, 4
          %s229 = int_to_ptr.vmem [resolvable:$true] %s228
          %231 = dma.vmem_to_smem %s229, 16, [#allocation6], [#allocation7]
        $region20: #{titanic_mlp.1} parent=11 // pred_fallthru
          _
        // Predicated region
        $region21: #{titanic_mlp.1} parent=11 // pred_check
          %p232 = pneg %p106
        $region22: #{titanic_mlp.1} parent=11 // pred_check_branch
          %234 = sbr.rel (%p232) target = $region24
        $region23: #{titanic_mlp.1} parent=11 // pred_region
          %s236 = ssub.s32 64, 64
          %237 = vsyncadd [#allocation7], %s236
          %s239 = sshll.u32 %s3, 4
          %s240 = int_to_ptr.vmem [resolvable:$true] %s239
          %242 = dma.vmem_to_smem %s240, 64, [#allocation8], [#allocation7]
        $region24: #{titanic_mlp.1} parent=11 // pred_fallthru
          _
        // Predicated region
        $region25: #{titanic_mlp.1} parent=11 // pred_check
          %p243 = pneg %p127
        $region26: #{titanic_mlp.1} parent=11 // pred_check_branch
          %245 = sbr.rel (%p243) target = $region28
        $region27: #{titanic_mlp.1} parent=11 // pred_region
          %s247 = ssub.s32 16, 16
          %248 = vsyncadd [#allocation10], %s247
          %s250 = sshll.u32 %s4, 4
          %s251 = int_to_ptr.vmem [resolvable:$true] %s250
          %253 = dma.vmem_to_smem %s251, 16, [#allocation9], [#allocation10]
        $region28: #{titanic_mlp.1} parent=11 // pred_fallthru
          _
        // Predicated region
        $region29: #{titanic_mlp.1} parent=11 // pred_check
          %p254 = pneg %p148
        $region30: #{titanic_mlp.1} parent=11 // pred_check_branch
          %256 = sbr.rel (%p254) target = $region32
        $region31: #{titanic_mlp.1} parent=11 // pred_region
          %s258 = ssub.s32 16, 16
          %259 = vsyncadd [#allocation10], %s258
          %s261 = sshll.u32 %s5, 4
          %s262 = int_to_ptr.vmem [resolvable:$true] %s261
          %264 = dma.vmem_to_smem %s262, 16, [#allocation11], [#allocation10]
        $region32: #{titanic_mlp.1} parent=11 // pred_fallthru
          _
        // Predicated region
        $region33: #{titanic_mlp.1} parent=11 // pred_check
          %p265 = pneg %p169
        $region34: #{titanic_mlp.1} parent=11 // pred_check_branch
          %267 = sbr.rel (%p265) target = $region36
        $region35: #{titanic_mlp.1} parent=11 // pred_region
          _
        $region36: #{titanic_mlp.1} parent=11 // pred_fallthru
          _
      $region12: #{titanic_mlp.1} parent=5 // pred_fallthru
        _
      %p268 = scmp.lt.s32.totalorder %s17, 3
      // Predicated region
      $region37: #{titanic_mlp.1} parent=5 // pred_check
        %p269 = pneg %p268
      $region38: #{titanic_mlp.1} parent=5 // pred_check_branch
        %271 = sbr.rel (%p269) target = $region40
      $region39: #{titanic_mlp.1} parent=5 // pred_region
        // Predicated region
        $region41: #{titanic_mlp.1} parent=39 // pred_check
          %p272 = pneg %p37
        $region42: #{titanic_mlp.1} parent=39 // pred_check_branch
          %274 = sbr.rel (%p272) target = $region44
        $region43: #{titanic_mlp.1} parent=39 // pred_region
          %s275 = sand.u32 %s27, 1
          %s276 = sand.u32 %s27, 1
          %s277 = smul.addr %s276, 64
          %s278 = scalar_lea.vmem [#allocation3], %s277
          %s279 = smul.addr %s17, 8
          %s280 = scalar_lea.vmem %s0, %s279
          // Predicated region
          $region45: #{titanic_mlp.1} parent=43 // pred_check
            _
          $region46: #{titanic_mlp.1} parent=43 // pred_check_branch
            %282 = sbr.rel (0) target = $region48
          $region47: #{titanic_mlp.1} parent=43 // pred_region
            // Predicated region
            $region49: #{titanic_mlp.1} parent=47 // pred_check
              _
            $region50: #{titanic_mlp.1} parent=47 // pred_check_branch
              %284 = sbr.rel (0) target = $region52
            $region51: #{titanic_mlp.1} parent=47 // pred_region
              // Predicated region
              $region64: #{titanic_mlp.1} parent=51 // pred_check
                _
              $region65: #{titanic_mlp.1} parent=51 // pred_check_branch
                %314 = sbr.rel (0) target = $region67
              $region66: #{titanic_mlp.1} parent=51 // pred_region
                loop: start=0, step=1, limit=1
                $region68: #{titanic_mlp.1} parent=66 // loop_pre_header
                  _
                $region69: #{titanic_mlp.1} parent=66 // loop_header
                  %s316 = sphi 0, %s320
                  %p317 = scmp.ge.s32.totalorder %s316, 1
                  %s321 = sphi %s280, %s280
                  %s322 = sphi %s278, %s278
                $region70: #{titanic_mlp.1} parent=66 // loop_header_branch
                  %319 = sbr.rel (%p317) target = $region74
                $region71: #{titanic_mlp.1} parent=66 // loop_body
                  %v323 = vld [vmem:[%s321] sm:$0xff]
                  %324 = vst [vmem:[%s322] sm:$0xff] %v323
                  %v325 = vld [vmem:[%s321 + $0x18] sm:$0xff]
                  %326 = vst [vmem:[%s322 + $0x8] sm:$0xff] %v325
                  %v327 = vld [vmem:[%s321 + $0x30] sm:$0xff]
                  %328 = vst [vmem:[%s322 + $0x10] sm:$0xff] %v327
                  %v329 = vld [vmem:[%s321 + $0x48] sm:$0xff]
                  %330 = vst [vmem:[%s322 + $0x18] sm:$0xff] %v329
                  %v331 = vld [vmem:[%s321 + $0x60] sm:$0xff]
                  %332 = vst [vmem:[%s322 + $0x20] sm:$0xff] %v331
                  %v333 = vld [vmem:[%s321 + $0x78] sm:$0xff]
                  %334 = vst [vmem:[%s322 + $0x28] sm:$0xff] %v333
                  %v335 = vld [vmem:[%s321 + $0x90] sm:$0xff]
                  %336 = vst [vmem:[%s322 + $0x30] sm:$0xff] %v335
                  %v337 = vld [vmem:[%s321 + $0xa8] sm:$0xff]
                  %338 = vst [vmem:[%s322 + $0x38] sm:$0xff] %v337
                $region72: #{titanic_mlp.1} parent=66 // loop_footer
                  %s320 = sadd.s32 1, %s316
                $region73: #{titanic_mlp.1} parent=66 // loop_footer_branch
                  %315 = sbr.rel target = $region69
                $region74: #{titanic_mlp.1} parent=66 // loop_exit
                  _
              $region67: #{titanic_mlp.1} parent=51 // pred_fallthru
                _
              // Predicated region
              $region75: #{titanic_mlp.1} parent=51 // pred_check
                _
              $region76: #{titanic_mlp.1} parent=51 // pred_check_branch
                %340 = sbr.rel target = $region78
              $region77: #{titanic_mlp.1} parent=51 // pred_region
                _
              $region78: #{titanic_mlp.1} parent=51 // pred_fallthru
                _
            $region52: #{titanic_mlp.1} parent=47 // pred_fallthru
              _
            // Predicated region
            $region53: #{titanic_mlp.1} parent=47 // pred_check
              _
            $region54: #{titanic_mlp.1} parent=47 // pred_check_branch
              %286 = sbr.rel target = $region56
            $region55: #{titanic_mlp.1} parent=47 // pred_region
              %s288 = ssub.s32 256, 1
              loop: start=0, step=1, limit=1
              $region57: #{titanic_mlp.1} parent=55 // loop_pre_header
                _
              $region58: #{titanic_mlp.1} parent=55 // loop_header
                %s290 = sphi 0, %s294
                %p291 = scmp.ge.s32.totalorder %s290, 1
                %s295 = sphi %s280, %s280
                %s296 = sphi %s278, %s278
              $region59: #{titanic_mlp.1} parent=55 // loop_header_branch
                %293 = sbr.rel (%p291) target = $region63
              $region60: #{titanic_mlp.1} parent=55 // loop_body
                %v297 = vld [vmem:[%s295] sm:%s288]
                %298 = vst [vmem:[%s296] sm:%s288] %v297
                %v299 = vld [vmem:[%s295 + $0x18] sm:%s288]
                %300 = vst [vmem:[%s296 + $0x8] sm:%s288] %v299
                %v301 = vld [vmem:[%s295 + $0x30] sm:%s288]
                %302 = vst [vmem:[%s296 + $0x10] sm:%s288] %v301
                %v303 = vld [vmem:[%s295 + $0x48] sm:%s288]
                %304 = vst [vmem:[%s296 + $0x18] sm:%s288] %v303
                %v305 = vld [vmem:[%s295 + $0x60] sm:%s288]
                %306 = vst [vmem:[%s296 + $0x20] sm:%s288] %v305
                %v307 = vld [vmem:[%s295 + $0x78] sm:%s288]
                %308 = vst [vmem:[%s296 + $0x28] sm:%s288] %v307
                %v309 = vld [vmem:[%s295 + $0x90] sm:%s288]
                %310 = vst [vmem:[%s296 + $0x30] sm:%s288] %v309
                %v311 = vld [vmem:[%s295 + $0xa8] sm:%s288]
                %312 = vst [vmem:[%s296 + $0x38] sm:%s288] %v311
              $region61: #{titanic_mlp.1} parent=55 // loop_footer
                %s294 = sadd.s32 1, %s290
              $region62: #{titanic_mlp.1} parent=55 // loop_footer_branch
                %289 = sbr.rel target = $region58
              $region63: #{titanic_mlp.1} parent=55 // loop_exit
                _
            $region56: #{titanic_mlp.1} parent=47 // pred_fallthru
              _
          $region48: #{titanic_mlp.1} parent=43 // pred_fallthru
            _
          %341 = vnop
        $region44: #{titanic_mlp.1} parent=39 // pred_fallthru
          _
      $region40: #{titanic_mlp.1} parent=5 // pred_fallthru
        _
      %p342 = scmp.le.s32.totalorder 1, %s17
      %p343 = scmp.lt.s32.totalorder %s17, 4
      %p344 = pnand %p342, %p343
      %p345 = pneg %p344
      // Predicated region
      $region79: #{titanic_mlp.1} parent=5 // pred_check
        _
      $region80: #{titanic_mlp.1} parent=5 // pred_check_branch
        %347 = sbr.rel (%p344) target = $region82
      $region81: #{titanic_mlp.1} parent=5 // pred_region
        %s348 = ssub.s32 %s17, 1
        %s349 = sand.u32 %s30, 1
        %s350 = sand.u32 %s30, 1
        %s351 = smul.addr %s350, 64
        %s352 = scalar_lea.vmem [#allocation3], %s351
        // Predicated region
        $region83: #{titanic_mlp.1} parent=81 // pred_check
          %p353 = pneg %p43
        $region84: #{titanic_mlp.1} parent=81 // pred_check_branch
          %355 = sbr.rel (%p353) target = $region86
        $region85: #{titanic_mlp.1} parent=81 // pred_region
          _
        $region86: #{titanic_mlp.1} parent=81 // pred_fallthru
          _
        // Predicated region
        $region87: #{titanic_mlp.1} parent=81 // pred_check
          %p356 = pneg %p64
        $region88: #{titanic_mlp.1} parent=81 // pred_check_branch
          %358 = sbr.rel (%p356) target = $region90
        $region89: #{titanic_mlp.1} parent=81 // pred_region
          %359 = dma.done [#allocation5], 128
        $region90: #{titanic_mlp.1} parent=81 // pred_fallthru
          _
        // Predicated region
        $region91: #{titanic_mlp.1} parent=81 // pred_check
          %p360 = pneg %p85
        $region92: #{titanic_mlp.1} parent=81 // pred_check_branch
          %362 = sbr.rel (%p360) target = $region94
        $region93: #{titanic_mlp.1} parent=81 // pred_region
          %363 = dma.done [#allocation7], 16
        $region94: #{titanic_mlp.1} parent=81 // pred_fallthru
          _
        // Predicated region
        $region95: #{titanic_mlp.1} parent=81 // pred_check
          %p364 = pneg %p106
        $region96: #{titanic_mlp.1} parent=81 // pred_check_branch
          %366 = sbr.rel (%p364) target = $region98
        $region97: #{titanic_mlp.1} parent=81 // pred_region
          %367 = dma.done [#allocation7], 64
        $region98: #{titanic_mlp.1} parent=81 // pred_fallthru
          _
        // Predicated region
        $region99: #{titanic_mlp.1} parent=81 // pred_check
          %p368 = pneg %p127
        $region100: #{titanic_mlp.1} parent=81 // pred_check_branch
          %370 = sbr.rel (%p368) target = $region102
        $region101: #{titanic_mlp.1} parent=81 // pred_region
          %371 = dma.done [#allocation10], 16
        $region102: #{titanic_mlp.1} parent=81 // pred_fallthru
          _
        // Predicated region
        $region103: #{titanic_mlp.1} parent=81 // pred_check
          %p372 = pneg %p148
        $region104: #{titanic_mlp.1} parent=81 // pred_check_branch
          %374 = sbr.rel (%p372) target = $region106
        $region105: #{titanic_mlp.1} parent=81 // pred_region
          %375 = dma.done [#allocation10], 16
        $region106: #{titanic_mlp.1} parent=81 // pred_fallthru
          _
        %376 = sfence
        %s377 = sand.u32 %s30, 1
        %s378 = sand.u32 %s30, 1
        %s379 = smul.addr %s378, 64
        %s380 = scalar_lea.vmem [#allocation3], %s379
        %p381 = pneg %p43
        %p382 = pneg %p40
        %p383 = pneg %p64
        %p384 = pneg %p61
        %p385 = pneg %p85
        %p386 = pneg %p82
        %p387 = pneg %p106
        %p388 = pneg %p103
        %p389 = pneg %p127
        %p390 = pneg %p124
        %p391 = pneg %p148
        %p392 = pneg %p145
        %p393 = pneg %p169
        %p394 = pneg %p166
        %p395 = pneg %p195
        %p396 = pneg %p192
        %p397 = scmp.lt.s32.totalorder %s22, 2
        %s398 = scalar_select %p397, %s22, 2
        %s399 = smul.addr %s398, 8
        %s400 = scalar_lea.vmem %s7, %s399
        %p401 = scmp.lt.s32.totalorder %s22, 2
        %s402 = scalar_select %p401, %s22, 2
        %s403 = smul.addr %s402, 8
        %s404 = scalar_lea.vmem %s7, %s403
        %v405 = vld [vmem:[%s352] sm:$0xff]
        %s406 = scalar_lea.vmem %s352, 8 [#allocation3]
        %v407 = vld [vmem:[%s406] sm:$0xff]
        %s408 = scalar_lea.vmem %s352, 16 [#allocation3]
        %v409 = vld [vmem:[%s408] sm:$0xff]
        %s410 = scalar_lea.vmem %s352, 24 [#allocation3]
        %v411 = vld [vmem:[%s410] sm:$0xff]
        %s412 = scalar_lea.vmem %s352, 32 [#allocation3]
        %v413 = vld [vmem:[%s412] sm:$0xff]
        %s414 = scalar_lea.vmem %s352, 40 [#allocation3]
        %v415 = vld [vmem:[%s414] sm:$0xff]
        %s416 = scalar_lea.vmem %s352, 48 [#allocation3]
        %v417 = vld [vmem:[%s416] sm:$0xff]
        %s418 = scalar_lea.vmem %s352, 56 [#allocation3]
        %v419 = vld [vmem:[%s418] sm:$0xff]
        %s420 = sld [smem:[#allocation4]]
        %v421 = vstv %s420
        %v422 = vmul.f32 %v405, %v421
        %s423 = sld [smem:[#allocation6]]
        %v424 = vstv %s423
        %v425 = vadd.f32 %v422, %v424
        %s426 = sld [smem:[#allocation4 + $0x1]]
        %v427 = vstv %s426
        %v428 = vmul.f32 %v407, %v427
        %v429 = vadd.f32 %v425, %v428
        %s430 = sld [smem:[#allocation4 + $0x2]]
        %v431 = vstv %s430
        %v432 = vmul.f32 %v409, %v431
        %v433 = vadd.f32 %v429, %v432
        %s434 = sld [smem:[#allocation4 + $0x3]]
        %v435 = vstv %s434
        %v436 = vmul.f32 %v411, %v435
        %v437 = vadd.f32 %v433, %v436
        %s438 = sld [smem:[#allocation4 + $0x4]]
        %v439 = vstv %s438
        %v440 = vmul.f32 %v413, %v439
        %v441 = vadd.f32 %v437, %v440
        %s442 = sld [smem:[#allocation4 + $0x5]]
        %v443 = vstv %s442
        %v444 = vmul.f32 %v415, %v443
        %v445 = vadd.f32 %v441, %v444
        %s446 = sld [smem:[#allocation4 + $0x6]]
        %v447 = vstv %s446
        %v448 = vmul.f32 %v417, %v447
        %v449 = vadd.f32 %v445, %v448
        %s450 = sld [smem:[#allocation4 + $0x7]]
        %v451 = vstv %s450
        %v452 = vmul.f32 %v419, %v451
        %v453 = vadd.f32 %v449, %v452
        %v454 = vmul.f32 %v453, 0.5
        %v455 = vtanh.pop %v454
        %v456 = vmul.f32 %v455, 0.5
        %v457 = vadd.f32 %v456, 0.5
        %s458 = sld [smem:[#allocation4 + $0x80]]
        %v459 = vstv %s458
        %v460 = vmul.f32 %v405, %v459
        %s461 = sld [smem:[#allocation6 + $0x1]]
        %v462 = vstv %s461
        %v463 = vadd.f32 %v460, %v462
        %s464 = sld [smem:[#allocation4 + $0x81]]
        %v465 = vstv %s464
        %v466 = vmul.f32 %v407, %v465
        %v467 = vadd.f32 %v463, %v466
        %s468 = sld [smem:[#allocation4 + $0x82]]
        %v469 = vstv %s468
        %v470 = vmul.f32 %v409, %v469
        %v471 = vadd.f32 %v467, %v470
        %s472 = sld [smem:[#allocation4 + $0x83]]
        %v473 = vstv %s472
        %v474 = vmul.f32 %v411, %v473
        %v475 = vadd.f32 %v471, %v474
        %s476 = sld [smem:[#allocation4 + $0x84]]
        %v477 = vstv %s476
        %v478 = vmul.f32 %v413, %v477
        %v479 = vadd.f32 %v475, %v478
        %s480 = sld [smem:[#allocation4 + $0x85]]
        %v481 = vstv %s480
        %v482 = vmul.f32 %v415, %v481
        %v483 = vadd.f32 %v479, %v482
        %s484 = sld [smem:[#allocation4 + $0x86]]
        %v485 = vstv %s484
        %v486 = vmul.f32 %v417, %v485
        %v487 = vadd.f32 %v483, %v486
        %s488 = sld [smem:[#allocation4 + $0x87]]
        %v489 = vstv %s488
        %v490 = vmul.f32 %v419, %v489
        %v491 = vadd.f32 %v487, %v490
        %v492 = vmul.f32 %v491, 0.5
        %v493 = vtanh.pop %v492
        %v494 = vmul.f32 %v493, 0.5
        %v495 = vadd.f32 %v494, 0.5
        %s496 = sld [smem:[#allocation4 + $0x100]]
        %v497 = vstv %s496
        %v498 = vmul.f32 %v405, %v497
        %s499 = sld [smem:[#allocation6 + $0x2]]
        %v500 = vstv %s499
        %v501 = vadd.f32 %v498, %v500
        %s502 = sld [smem:[#allocation4 + $0x101]]
        %v503 = vstv %s502
        %v504 = vmul.f32 %v407, %v503
        %v505 = vadd.f32 %v501, %v504
        %s506 = sld [smem:[#allocation4 + $0x102]]
        %v507 = vstv %s506
        %v508 = vmul.f32 %v409, %v507
        %v509 = vadd.f32 %v505, %v508
        %s510 = sld [smem:[#allocation4 + $0x103]]
        %v511 = vstv %s510
        %v512 = vmul.f32 %v411, %v511
        %v513 = vadd.f32 %v509, %v512
        %s514 = sld [smem:[#allocation4 + $0x104]]
        %v515 = vstv %s514
        %v516 = vmul.f32 %v413, %v515
        %v517 = vadd.f32 %v513, %v516
        %s518 = sld [smem:[#allocation4 + $0x105]]
        %v519 = vstv %s518
        %v520 = vmul.f32 %v415, %v519
        %v521 = vadd.f32 %v517, %v520
        %s522 = sld [smem:[#allocation4 + $0x106]]
        %v523 = vstv %s522
        %v524 = vmul.f32 %v417, %v523
        %v525 = vadd.f32 %v521, %v524
        %s526 = sld [smem:[#allocation4 + $0x107]]
        %v527 = vstv %s526
        %v528 = vmul.f32 %v419, %v527
        %v529 = vadd.f32 %v525, %v528
        %v530 = vmul.f32 %v529, 0.5
        %v531 = vtanh.pop %v530
        %v532 = vmul.f32 %v531, 0.5
        %v533 = vadd.f32 %v532, 0.5
        %s534 = sld [smem:[#allocation4 + $0x180]]
        %v535 = vstv %s534
        %v536 = vmul.f32 %v405, %v535
        %s537 = sld [smem:[#allocation6 + $0x3]]
        %v538 = vstv %s537
        %v539 = vadd.f32 %v536, %v538
        %s540 = sld [smem:[#allocation4 + $0x181]]
        %v541 = vstv %s540
        %v542 = vmul.f32 %v407, %v541
        %v543 = vadd.f32 %v539, %v542
        %s544 = sld [smem:[#allocation4 + $0x182]]
        %v545 = vstv %s544
        %v546 = vmul.f32 %v409, %v545
        %v547 = vadd.f32 %v543, %v546
        %s548 = sld [smem:[#allocation4 + $0x183]]
        %v549 = vstv %s548
        %v550 = vmul.f32 %v411, %v549
        %v551 = vadd.f32 %v547, %v550
        %s552 = sld [smem:[#allocation4 + $0x184]]
        %v553 = vstv %s552
        %v554 = vmul.f32 %v413, %v553
        %v555 = vadd.f32 %v551, %v554
        %s556 = sld [smem:[#allocation4 + $0x185]]
        %v557 = vstv %s556
        %v558 = vmul.f32 %v415, %v557
        %v559 = vadd.f32 %v555, %v558
        %s560 = sld [smem:[#allocation4 + $0x186]]
        %v561 = vstv %s560
        %v562 = vmul.f32 %v417, %v561
        %v563 = vadd.f32 %v559, %v562
        %s564 = sld [smem:[#allocation4 + $0x187]]
        %v565 = vstv %s564
        %v566 = vmul.f32 %v419, %v565
        %v567 = vadd.f32 %v563, %v566
        %v568 = vmul.f32 %v567, 0.5
        %v569 = vtanh.pop %v568
        %v570 = vmul.f32 %v569, 0.5
        %v571 = vadd.f32 %v570, 0.5
        %s572 = sld [smem:[#allocation4 + $0x200]]
        %v573 = vstv %s572
        %v574 = vmul.f32 %v405, %v573
        %s575 = sld [smem:[#allocation6 + $0x4]]
        %v576 = vstv %s575
        %v577 = vadd.f32 %v574, %v576
        %s578 = sld [smem:[#allocation4 + $0x201]]
        %v579 = vstv %s578
        %v580 = vmul.f32 %v407, %v579
        %v581 = vadd.f32 %v577, %v580
        %s582 = sld [smem:[#allocation4 + $0x202]]
        %v583 = vstv %s582
        %v584 = vmul.f32 %v409, %v583
        %v585 = vadd.f32 %v581, %v584
        %s586 = sld [smem:[#allocation4 + $0x203]]
        %v587 = vstv %s586
        %v588 = vmul.f32 %v411, %v587
        %v589 = vadd.f32 %v585, %v588
        %s590 = sld [smem:[#allocation4 + $0x204]]
        %v591 = vstv %s590
        %v592 = vmul.f32 %v413, %v591
        %v593 = vadd.f32 %v589, %v592
        %s594 = sld [smem:[#allocation4 + $0x205]]
        %v595 = vstv %s594
        %v596 = vmul.f32 %v415, %v595
        %v597 = vadd.f32 %v593, %v596
        %s598 = sld [smem:[#allocation4 + $0x206]]
        %v599 = vstv %s598
        %v600 = vmul.f32 %v417, %v599
        %v601 = vadd.f32 %v597, %v600
        %s602 = sld [smem:[#allocation4 + $0x207]]
        %v603 = vstv %s602
        %v604 = vmul.f32 %v419, %v603
        %v605 = vadd.f32 %v601, %v604
        %v606 = vmul.f32 %v605, 0.5
        %v607 = vtanh.pop %v606
        %v608 = vmul.f32 %v607, 0.5
        %v609 = vadd.f32 %v608, 0.5
        %s610 = sld [smem:[#allocation4 + $0x280]]
        %v611 = vstv %s610
        %v612 = vmul.f32 %v405, %v611
        %s613 = sld [smem:[#allocation6 + $0x5]]
        %v614 = vstv %s613
        %v615 = vadd.f32 %v612, %v614
        %s616 = sld [smem:[#allocation4 + $0x281]]
        %v617 = vstv %s616
        %v618 = vmul.f32 %v407, %v617
        %v619 = vadd.f32 %v615, %v618
        %s620 = sld [smem:[#allocation4 + $0x282]]
        %v621 = vstv %s620
        %v622 = vmul.f32 %v409, %v621
        %v623 = vadd.f32 %v619, %v622
        %s624 = sld [smem:[#allocation4 + $0x283]]
        %v625 = vstv %s624
        %v626 = vmul.f32 %v411, %v625
        %v627 = vadd.f32 %v623, %v626
        %s628 = sld [smem:[#allocation4 + $0x284]]
        %v629 = vstv %s628
        %v630 = vmul.f32 %v413, %v629
        %v631 = vadd.f32 %v627, %v630
        %s632 = sld [smem:[#allocation4 + $0x285]]
        %v633 = vstv %s632
        %v634 = vmul.f32 %v415, %v633
        %v635 = vadd.f32 %v631, %v634
        %s636 = sld [smem:[#allocation4 + $0x286]]
        %v637 = vstv %s636
        %v638 = vmul.f32 %v417, %v637
        %v639 = vadd.f32 %v635, %v638
        %s640 = sld [smem:[#allocation4 + $0x287]]
        %v641 = vstv %s640
        %v642 = vmul.f32 %v419, %v641
        %v643 = vadd.f32 %v639, %v642
        %v644 = vmul.f32 %v643, 0.5
        %v645 = vtanh.pop %v644
        %v646 = vmul.f32 %v645, 0.5
        %v647 = vadd.f32 %v646, 0.5
        %s648 = sld [smem:[#allocation8]]
        %v649 = vstv %s648
        %v650 = vmul.f32 %v457, %v649
        %s651 = sld [smem:[#allocation9]]
        %v652 = vstv %s651
        %v653 = vadd.f32 %v650, %v652
        %s654 = sld [smem:[#allocation8 + $0x1]]
        %v655 = vstv %s654
        %v656 = vmul.f32 %v495, %v655
        %v657 = vadd.f32 %v653, %v656
        %s658 = sld [smem:[#allocation8 + $0x2]]
        %v659 = vstv %s658
        %v660 = vmul.f32 %v533, %v659
        %v661 = vadd.f32 %v657, %v660
        %s662 = sld [smem:[#allocation8 + $0x3]]
        %v663 = vstv %s662
        %v664 = vmul.f32 %v571, %v663
        %v665 = vadd.f32 %v661, %v664
        %s666 = sld [smem:[#allocation8 + $0x4]]
        %v667 = vstv %s666
        %v668 = vmul.f32 %v609, %v667
        %v669 = vadd.f32 %v665, %v668
        %s670 = sld [smem:[#allocation8 + $0x5]]
        %v671 = vstv %s670
        %v672 = vmul.f32 %v647, %v671
        %v673 = vadd.f32 %v669, %v672
        %v674 = vmul.f32 %v673, 0.5
        %v675 = vtanh.pop %v674
        %v676 = vmul.f32 %v675, 0.5
        %v677 = vadd.f32 %v676, 0.5
        %s678 = sld [smem:[#allocation8 + $0x80]]
        %v679 = vstv %s678
        %v680 = vmul.f32 %v457, %v679
        %s681 = sld [smem:[#allocation9 + $0x1]]
        %v682 = vstv %s681
        %v683 = vadd.f32 %v680, %v682
        %s684 = sld [smem:[#allocation8 + $0x81]]
        %v685 = vstv %s684
        %v686 = vmul.f32 %v495, %v685
        %v687 = vadd.f32 %v683, %v686
        %s688 = sld [smem:[#allocation8 + $0x82]]
        %v689 = vstv %s688
        %v690 = vmul.f32 %v533, %v689
        %v691 = vadd.f32 %v687, %v690
        %s692 = sld [smem:[#allocation8 + $0x83]]
        %v693 = vstv %s692
        %v694 = vmul.f32 %v571, %v693
        %v695 = vadd.f32 %v691, %v694
        %s696 = sld [smem:[#allocation8 + $0x84]]
        %v697 = vstv %s696
        %v698 = vmul.f32 %v609, %v697
        %v699 = vadd.f32 %v695, %v698
        %s700 = sld [smem:[#allocation8 + $0x85]]
        %v701 = vstv %s700
        %v702 = vmul.f32 %v647, %v701
        %v703 = vadd.f32 %v699, %v702
        %v704 = vmul.f32 %v703, 0.5
        %v705 = vtanh.pop %v704
        %v706 = vmul.f32 %v705, 0.5
        %v707 = vadd.f32 %v706, 0.5
        %s708 = sld [smem:[#allocation8 + $0x100]]
        %v709 = vstv %s708
        %v710 = vmul.f32 %v457, %v709
        %s711 = sld [smem:[#allocation9 + $0x2]]
        %v712 = vstv %s711
        %v713 = vadd.f32 %v710, %v712
        %s714 = sld [smem:[#allocation8 + $0x101]]
        %v715 = vstv %s714
        %v716 = vmul.f32 %v495, %v715
        %v717 = vadd.f32 %v713, %v716
        %s718 = sld [smem:[#allocation8 + $0x102]]
        %v719 = vstv %s718
        %v720 = vmul.f32 %v533, %v719
        %v721 = vadd.f32 %v717, %v720
        %s722 = sld [smem:[#allocation8 + $0x103]]
        %v723 = vstv %s722
        %v724 = vmul.f32 %v571, %v723
        %v725 = vadd.f32 %v721, %v724
        %s726 = sld [smem:[#allocation8 + $0x104]]
        %v727 = vstv %s726
        %v728 = vmul.f32 %v609, %v727
        %v729 = vadd.f32 %v725, %v728
        %s730 = sld [smem:[#allocation8 + $0x105]]
        %v731 = vstv %s730
        %v732 = vmul.f32 %v647, %v731
        %v733 = vadd.f32 %v729, %v732
        %v734 = vmul.f32 %v733, 0.5
        %v735 = vtanh.pop %v734
        %v736 = vmul.f32 %v735, 0.5
        %v737 = vadd.f32 %v736, 0.5
        %s738 = sld [smem:[#allocation8 + $0x180]]
        %v739 = vstv %s738
        %v740 = vmul.f32 %v457, %v739
        %s741 = sld [smem:[#allocation9 + $0x3]]
        %v742 = vstv %s741
        %v743 = vadd.f32 %v740, %v742
        %s744 = sld [smem:[#allocation8 + $0x181]]
        %v745 = vstv %s744
        %v746 = vmul.f32 %v495, %v745
        %v747 = vadd.f32 %v743, %v746
        %s748 = sld [smem:[#allocation8 + $0x182]]
        %v749 = vstv %s748
        %v750 = vmul.f32 %v533, %v749
        %v751 = vadd.f32 %v747, %v750
        %s752 = sld [smem:[#allocation8 + $0x183]]
        %v753 = vstv %s752
        %v754 = vmul.f32 %v571, %v753
        %v755 = vadd.f32 %v751, %v754
        %s756 = sld [smem:[#allocation8 + $0x184]]
        %v757 = vstv %s756
        %v758 = vmul.f32 %v609, %v757
        %v759 = vadd.f32 %v755, %v758
        %s760 = sld [smem:[#allocation8 + $0x185]]
        %v761 = vstv %s760
        %v762 = vmul.f32 %v647, %v761
        %v763 = vadd.f32 %v759, %v762
        %v764 = vmul.f32 %v763, 0.5
        %v765 = vtanh.pop %v764
        %v766 = vmul.f32 %v765, 0.5
        %v767 = vadd.f32 %v766, 0.5
        %s768 = sld [smem:[#allocation11]]
        %v769 = vstv %s768
        %v770 = vmul.f32 %v677, %v769
        %s771 = sld [smem:[#allocation2]]
        %v772 = vstv %s771
        %v773 = vadd.f32 %v770, %v772
        %s774 = sld [smem:[#allocation11 + $0x1]]
        %v775 = vstv %s774
        %v776 = vmul.f32 %v707, %v775
        %v777 = vadd.f32 %v773, %v776
        %s778 = sld [smem:[#allocation11 + $0x2]]
        %v779 = vstv %s778
        %v780 = vmul.f32 %v737, %v779
        %v781 = vadd.f32 %v777, %v780
        %s782 = sld [smem:[#allocation11 + $0x3]]
        %v783 = vstv %s782
        %v784 = vmul.f32 %v767, %v783
        %v785 = vadd.f32 %v781, %v784
        %v786 = vmul.f32 %v785, 0.5
        %v787 = vtanh.pop %v786
        %v788 = vmul.f32 %v787, 0.5
        %v789 = vadd.f32 %v788, 0.5
        %790 = vst [vmem:[%s404] sm:$0xff] %v789
        %p791 = scmp.lt.s32.totalorder %s22, 2
        %s792 = scalar_select %p791, %s22, 2
        %s793 = smul.addr %s792, 8
        %s794 = scalar_lea.vmem %s7, %s793
        // Predicated region
        $region107: #{titanic_mlp.1} parent=81 // pred_check
          %p795 = pneg %p192
        $region108: #{titanic_mlp.1} parent=81 // pred_check_branch
          %797 = sbr.rel (%p795) target = $region110
        $region109: #{titanic_mlp.1} parent=81 // pred_region
          _
        $region110: #{titanic_mlp.1} parent=81 // pred_fallthru
          _
      $region82: #{titanic_mlp.1} parent=5 // pred_fallthru
        _
      %p798 = scmp.le.s32.totalorder 2, %s17
      // Predicated region
      $region111: #{titanic_mlp.1} parent=5 // pred_check
        %p799 = pneg %p798
      $region112: #{titanic_mlp.1} parent=5 // pred_check_branch
        %801 = sbr.rel (%p799) target = $region114
      $region113: #{titanic_mlp.1} parent=5 // pred_region
        %s802 = ssub.s32 %s17, 2
        // Predicated region
        $region115: #{titanic_mlp.1} parent=113 // pred_check
          %p803 = pneg %p198
        $region116: #{titanic_mlp.1} parent=113 // pred_check_branch
          %805 = sbr.rel (%p803) target = $region118
        $region117: #{titanic_mlp.1} parent=113 // pred_region
          %p806 = scmp.lt.s32.totalorder %s23, 2
          %s807 = scalar_select %p806, %s23, 2
          %s808 = smul.addr %s807, 8
          %s809 = scalar_lea.vmem %s7, %s808
        $region118: #{titanic_mlp.1} parent=113 // pred_fallthru
          _
      $region114: #{titanic_mlp.1} parent=5 // pred_fallthru
        _
    $region6: #{titanic_mlp.1} parent=1 // loop_footer
      %s21 = sadd.s32 1, %s17
    $region7: #{titanic_mlp.1} parent=1 // loop_footer_branch
      %16 = sbr.rel target = $region3
    $region8: #{titanic_mlp.1} parent=1 // loop_exit
      _
    %810 = vsyncpa [#allocation5], 1
    %s811 = scalar_lea.sflag [#allocation5], 1
    %812 = vsyncpa %s811, 1
    %813 = vsyncpa [#allocation7], 1
    %814 = vsyncpa [#allocation10], 1

</llo_original>
